<compile_context>
chip_gen: v5e
topology: v5e:2x2
jax: 0.10.0
libtpu: 0.0.40
codegen_flags: <defaults>
</compile_context>

<pallas_src>
import functools
import math

import jax
import jax.numpy as jnp
from jax import lax
from jax.experimental import pallas as pl
from jax.experimental.pallas import tpu as pltpu


# ---------------------------------------------------------------------------
# hardware-adaptive knobs
# ---------------------------------------------------------------------------

def _tpu_info():
    try:
        return pltpu.get_tpu_info()
    except Exception:
        return None


def _vmem_limit_bytes():
    cap = 64 * 1024 * 1024                         # conservative (v7x-sized) default
    info = _tpu_info()
    if info is not None:
        try:
            cap = int(getattr(info, "vmem_capacity_bytes", cap))
        except Exception:
            pass
    # ~3/4 of physical VMEM, never above 100 MiB (v5e/v6e have 128 MiB, v7x 64 MiB)
    return int(min(cap * 3 // 4, 100 * 1024 * 1024))


def _num_tensorcores():
    info = _tpu_info()
    if info is not None:
        for attr in ("num_cores", "core_count", "num_tensorcores", "tensorcore_count"):
            v = getattr(info, attr, None)
            try:
                v = int(v)
            except Exception:
                continue
            if 1 <= v <= 16:
                return v
    return 1


def _ffn_tile(H):
    """Hidden-dim chunk for the FFN so the (R, tile) intermediate stays small."""
    if H <= 2048:
        return H
    for th in (2048, 1024, 512, 256, 128):
        if H % th == 0:
            return th
    return H


def _vocab_tile(V, BT, C, vmem_limit):
    """Lane-dense vocab tile that (double-buffered) fits the VMEM budget."""
    candidates = [tv for tv in (4096, 2048, 1024, 512, 256, 128) if V % tv == 0]
    if not candidates:
        return V
    for tv in candidates:
        need = 2 * (BT * tv * 4 + C * tv * 2 + tv * 4) + BT * C * 4
        if need <= vmem_limit // 2:
            return tv
    return candidates[-1]


# ---------------------------------------------------------------------------
# helpers
# ---------------------------------------------------------------------------

def _layer_norm(x, gamma, beta, eps=1e-5):
    # x: (R, C) f32, gamma/beta: (1, C) f32 — statistics kept in f32.
    mu = jnp.mean(x, axis=-1, keepdims=True)
    var = jnp.mean(jnp.square(x - mu), axis=-1, keepdims=True)
    return (x - mu) * lax.rsqrt(var + eps) * gamma + beta


# ---------------------------------------------------------------------------
# Pallas kernels
# ---------------------------------------------------------------------------

def block_kernel(x_ref, wqkv_ref, wo_ref, bo_ref,
                 ln1_g_ref, ln1_b_ref, ln2_g_ref, ln2_b_ref,
                 w1_ref, b1_ref, w2_ref, b2_ref,
                 lnf_g_ref, lnf_b_ref,
                 o_ref, attn_scratch,
                 *, batch_tile, seq, n_head, ffn_tile):
    """One (batch-tile, layer) grid step; activations stay resident in o_ref across layers."""
    l = pl.program_id(1)
    n_layers = pl.num_programs(1)

    @pl.when(l == 0)
    def _init():
        o_ref[...] = x_ref[...]                   # load embeddings once per batch tile

    h = o_ref[...]                                # (R, C) f32, previous layer's output
    R, C = h.shape
    hs = C // n_head
    scale = 1.0 / math.sqrt(hs)
    bf16 = jnp.bfloat16

    # ---- multi-head causal self-attention (pre-LN), fused QKV ----
    xln = _layer_norm(h, ln1_g_ref[0], ln1_b_ref[0])                       # f32
    qkv = jnp.dot(xln.astype(bf16), wqkv_ref[0],
                  preferred_element_type=jnp.float32)                      # (R, 3C) f32

    # causal additive bias generated in-kernel (no resident (T,T) buffer)
    row = lax.broadcasted_iota(jnp.int32, (seq, seq), 0)
    col = lax.broadcasted_iota(jnp.int32, (seq, seq), 1)
    bias = jnp.where(col <= row, 0.0, -1e30).astype(jnp.float32)           # (T, T)

    # per-head attention; head outputs packed head-major into a (R, C) scratch,
    # then ONE full-K W_o projection (MXU-filling K = C).
    for hh in range(n_head):
        q = qkv[:, hh * hs:(hh + 1) * hs].reshape(batch_tile, seq, hs).astype(bf16)
        k = qkv[:, C + hh * hs: C + (hh + 1) * hs].reshape(batch_tile, seq, hs).astype(bf16)
        v = qkv[:, 2 * C + hh * hs: 2 * C + (hh + 1) * hs].reshape(batch_tile, seq, hs).astype(bf16)

        att = jnp.einsum("bqd,bkd->bqk", q, k,
                         preferred_element_type=jnp.float32) * scale       # (Bt, T, T) f32
        att = att + bias[None]
        att = att - jnp.max(att, axis=-1, keepdims=True)
        p = jnp.exp(att)
        p = p * pl.reciprocal(jnp.sum(p, axis=-1, keepdims=True), approx=True)

        oh = jnp.einsum("bqk,bkd->bqd", p.astype(bf16), v,
                        preferred_element_type=jnp.float32)                # (Bt, T, hs)
        attn_scratch[:, hh * hs:(hh + 1) * hs] = oh.reshape(R, hs)

    sa = jnp.dot(attn_scratch[...].astype(bf16), wo_ref[0],
                 preferred_element_type=jnp.float32)                       # (R, C)
    h = h + sa + bo_ref[0]

    # ---- feed-forward (pre-LN): Linear(C,4C) -> ReLU -> Linear(4C,C), H-tiled ----
    xln2 = _layer_norm(h, ln2_g_ref[0], ln2_b_ref[0]).astype(bf16)
    H = w1_ref.shape[-1]
    ff = jnp.zeros((R, C), jnp.float32)
    for t in range(H // ffn_tile):
        lo, hi = t * ffn_tile, (t + 1) * ffn_tile
        h1 = jnp.dot(xln2, w1_ref[0, :, lo:hi],
                     preferred_element_type=jnp.float32) + b1_ref[0, :, lo:hi]
        h1 = jnp.maximum(h1, 0.0).astype(bf16)
        ff = ff + jnp.dot(h1, w2_ref[0, lo:hi, :],
                          preferred_element_type=jnp.float32)
    out = h + ff + b2_ref[0]

    o_ref[...] = out

    # final LayerNorm applied once, on the last layer step only
    @pl.when(l == n_layers - 1)
    def _final():
        o_ref[...] = _layer_norm(out, lnf_g_ref[...], lnf_b_ref[...])


def lm_head_kernel(x_ref, w_ref, bias_ref, o_ref):
    """One vocab tile of the vocabulary projection (LN already applied upstream)."""
    o_ref[...] = jnp.dot(x_ref[...].astype(jnp.bfloat16), w_ref[...],
                         preferred_element_type=jnp.float32) + bias_ref[...]


# ---------------------------------------------------------------------------
# pallas_call wrappers
# ---------------------------------------------------------------------------

def run_blocks(x2d, p, batch, seq, n_head):
    BT, C = x2d.shape
    H = p["w1"].shape[-1]
    L = p["wqkv"].shape[0]
    vmem_limit = _vmem_limit_bytes()

    ncores = _num_tensorcores()
    NB = ncores if (ncores > 1 and batch % ncores == 0) else 1
    Bt = batch // NB
    R = Bt * seq
    ffn_tile = _ffn_tile(H)

    per_layer = lambda shape: pl.BlockSpec((1,) + shape,
                                           lambda b, l: (l,) + (0,) * len(shape))
    const2 = lambda shape: pl.BlockSpec(shape, lambda b, l: (0,) * len(shape))

    flops = L * (24 * BT * C * C + 4 * batch * seq * seq * C)
    trans = L * (batch * n_head * seq * seq + 2 * BT)
    bytes_accessed = (2 * BT * C * 4
                      + NB * L * (2 * 12 * C * C + 4 * 10 * C))

    return pl.pallas_call(
        functools.partial(block_kernel, batch_tile=Bt, seq=seq,
                          n_head=n_head, ffn_tile=ffn_tile),
        out_shape=jax.ShapeDtypeStruct((BT, C), jnp.float32),
        grid_spec=pltpu.PrefetchScalarGridSpec(
            num_scalar_prefetch=0,
            grid=(NB, L),                               # batch tiles (parallel), layers (sequential)
            in_specs=[
                pl.BlockSpec((R, C), lambda b, l: (b, 0)),   # embeddings (read at l==0)
                per_layer((C, 3 * C)),                       # fused wqkv (bf16)
                per_layer((C, C)),                           # wo (bf16)
                per_layer((1, C)),                           # bo
                per_layer((1, C)), per_layer((1, C)),        # ln1 gamma, beta
                per_layer((1, C)), per_layer((1, C)),        # ln2 gamma, beta
                per_layer((C, H)), per_layer((1, H)),        # ffn w1 (bf16), b1
                per_layer((H, C)), per_layer((1, C)),        # ffn w2 (bf16), b2
                const2((1, C)), const2((1, C)),              # ln_f gamma, beta
            ],
            out_specs=pl.BlockSpec((R, C), lambda b, l: (b, 0)),   # resident across L
            scratch_shapes=[pltpu.VMEM((R, C), jnp.float32)],      # packed head outputs
        ),
        compiler_params=pltpu.CompilerParams(
            dimension_semantics=("parallel", "arbitrary"),
            vmem_limit_bytes=vmem_limit,
        ),
        cost_estimate=pl.CostEstimate(flops=int(flops),
                                      transcendentals=int(trans),
                                      bytes_accessed=int(bytes_accessed)),
    )(x2d, p["wqkv"], p["wo"], p["bo"],
      p["ln1_g"], p["ln1_b"], p["ln2_g"], p["ln2_b"],
      p["w1"], p["b1"], p["w2"], p["b2"],
      p["lnf_g"], p["lnf_b"])


def run_lm_head(x2d, w_lm, b_lm):
    BT, C = x2d.shape
    V = w_lm.shape[1]
    vmem_limit = _vmem_limit_bytes()
    TV = _vocab_tile(V, BT, C, vmem_limit)
    NV = V // TV

    flops = 2 * BT * C * V
    bytes_accessed = BT * C * 4 + 2 * C * V + 4 * V + 4 * BT * V

    return pl.pallas_call(
        lm_head_kernel,
        out_shape=jax.ShapeDtypeStruct((BT, V), jnp.float32),
        grid_spec=pltpu.PrefetchScalarGridSpec(
            num_scalar_prefetch=0,
            grid=(NV,),                                      # stream vocab tiles
            in_specs=[
                pl.BlockSpec((BT, C), lambda j: (0, 0)),     # x (already ln_f'd), resident
                pl.BlockSpec((C, TV), lambda j: (0, j)),     # lm_head W tile (bf16)
                pl.BlockSpec((1, TV), lambda j: (0, j)),     # lm_head b tile
            ],
            out_specs=pl.BlockSpec((BT, TV), lambda j: (0, j)),
        ),
        compiler_params=pltpu.CompilerParams(
            dimension_semantics=("parallel",),
            vmem_limit_bytes=vmem_limit,
        ),
        cost_estimate=pl.CostEstimate(flops=int(flops),
                                      transcendentals=0,
                                      bytes_accessed=int(bytes_accessed)),
    )(x2d, w_lm, b_lm)


# ---------------------------------------------------------------------------
# Model: parameter init + forward
# ---------------------------------------------------------------------------

def sinusoidal_pe(T, C):
    pos = jnp.arange(T, dtype=jnp.float32)[:, None]
    i = jnp.arange(0, C, 2, dtype=jnp.float32)[None, :]
    div = jnp.exp(-math.log(10000.0) * i / C)
    pe = jnp.zeros((T, C), jnp.float32)
    pe = pe.at[:, 0::2].set(jnp.sin(pos * div))
    pe = pe.at[:, 1::2].set(jnp.cos(pos * div))
    return pe                                                  # (T, C)


def init_params(key, vocab_size, n_embd, n_head, n_layer):
    C, H = n_embd, 4 * n_embd
    ks = jax.random.split(key, 6)
    nrm = lambda k, shape, dt=jnp.bfloat16: (
        0.02 * jax.random.normal(k, shape, jnp.float32)).astype(dt)

    return {
        "tok_emb": nrm(ks[0], (vocab_size, C), jnp.float32),
        "lnf_g": jnp.ones((1, C), jnp.float32),
        "lnf_b": jnp.zeros((1, C), jnp.float32),
        "w_lm": nrm(ks[1], (C, vocab_size)),                   # bf16
        "b_lm": jnp.zeros((1, vocab_size), jnp.float32),
        # per-layer stacked weights (layer axis first) for the fused-layer grid
        "wqkv": nrm(ks[2], (n_layer, C, 3 * C)),               # bf16, fused q|k|v (head-major)
        "wo":   nrm(ks[3], (n_layer, C, C)),                   # bf16, full output projection
        "bo":   jnp.zeros((n_layer, 1, C), jnp.float32),
        "ln1_g": jnp.ones((n_layer, 1, C), jnp.float32),
        "ln1_b": jnp.zeros((n_layer, 1, C), jnp.float32),
        "ln2_g": jnp.ones((n_layer, 1, C), jnp.float32),
        "ln2_b": jnp.zeros((n_layer, 1, C), jnp.float32),
        "w1":   nrm(ks[4], (n_layer, C, H)),                   # bf16
        "b1":   jnp.zeros((n_layer, 1, H), jnp.float32),
        "w2":   nrm(ks[5], (n_layer, H, C)),                   # bf16
        "b2":   jnp.zeros((n_layer, 1, C), jnp.float32),
    }


def language_model_forward(params, x_seq, n_head, y=None):
    """x_seq: (B, T) int32 token ids -> (logits (B, T, vocab), loss or None)."""
    B, T = x_seq.shape
    C = params["tok_emb"].shape[1]
    V = params["w_lm"].shape[1]

    # embedding lookup + sinusoidal positional encoding (glue, plain JAX)
    tok = jnp.take(params["tok_emb"], x_seq, axis=0)           # (B, T, C)
    x = tok + sinusoidal_pe(T, C)[None, :, :]
    x2d = x.reshape(B * T, C).astype(jnp.float32)

    h2d = run_blocks(x2d, params, B, T, n_head)                # all layers + ln_f
    logits2d = run_lm_head(h2d, params["w_lm"], params["b_lm"])  # (B*T, V)
    logits = logits2d.reshape(B, T, V)

    if y is None:
        loss = None
    else:
        lp = jax.nn.log_softmax(logits2d, axis=-1)
        loss = -jnp.mean(lp[jnp.arange(B * T), y.reshape(-1)])
    return logits, loss


# ---------------------------------------------------------------------------
if __name__ == "__main__":
    vocab_size, n_embd, block_size, n_head, n_layer = 64, 32, 8, 4, 2
    B, T = 2, block_size

    key = jax.random.PRNGKey(0)
    k_par, k_tok = jax.random.split(key)
    params = init_params(k_par, vocab_size, n_embd, n_head, n_layer)
    x_seq = jax.random.randint(k_tok, (B, T), 0, vocab_size, dtype=jnp.int32)

    logits, loss = language_model_forward(params, x_seq, n_head)
    logits = jax.block_until_ready(logits)
    assert logits.shape == (B, T, vocab_size)
    assert bool(jnp.all(jnp.isfinite(logits)))
    # TODO(synk): `generate` (multinomial sampling loop + perplexity print) is host-side
    # inference glue, not part of the forward kernels, and is omitted.
    print("KERNEL_OK")
</pallas_src>

<mosaic_0001>
module attributes {stable_mosaic.version = 11 : i64} {
  func.func @block_kernel(%arg0: i32, %arg1: i32, %arg2: memref<16x32xf32, #tpu.memory_space<vmem>>, %arg3: memref<1x32x96xbf16, #tpu.memory_space<vmem>>, %arg4: memref<1x32x32xbf16, #tpu.memory_space<vmem>>, %arg5: memref<1x1x32xf32, #tpu.memory_space<vmem>>, %arg6: memref<1x1x32xf32, #tpu.memory_space<vmem>>, %arg7: memref<1x1x32xf32, #tpu.memory_space<vmem>>, %arg8: memref<1x1x32xf32, #tpu.memory_space<vmem>>, %arg9: memref<1x1x32xf32, #tpu.memory_space<vmem>>, %arg10: memref<1x32x128xbf16, #tpu.memory_space<vmem>>, %arg11: memref<1x1x128xf32, #tpu.memory_space<vmem>>, %arg12: memref<1x128x32xbf16, #tpu.memory_space<vmem>>, %arg13: memref<1x1x32xf32, #tpu.memory_space<vmem>>, %arg14: memref<1x32xf32, #tpu.memory_space<vmem>>, %arg15: memref<1x32xf32, #tpu.memory_space<vmem>>, %arg16: memref<16x32xf32, #tpu.memory_space<vmem>>, %arg17: memref<16x32xf32, #tpu.memory_space<vmem>>) attributes {dimension_semantics = [#tpu.dimension_semantics<parallel>, #tpu.dimension_semantics<arbitrary>], iteration_bounds = array<i64: 1, 2>, scalar_prefetch = 0 : i64, scratch_operands = 1 : i64, tpu.core_type = #tpu.core_type<tc>, window_params = [{transform_indices = @transform_0, window_bounds = array<i64: 16, 32>}, {transform_indices = @transform_1, window_bounds = array<i64: 1, 32, 96>}, {transform_indices = @transform_2, window_bounds = array<i64: 1, 32, 32>}, {transform_indices = @transform_3, window_bounds = array<i64: 1, 1, 32>}, {transform_indices = @transform_4, window_bounds = array<i64: 1, 1, 32>}, {transform_indices = @transform_5, window_bounds = array<i64: 1, 1, 32>}, {transform_indices = @transform_6, window_bounds = array<i64: 1, 1, 32>}, {transform_indices = @transform_7, window_bounds = array<i64: 1, 1, 32>}, {transform_indices = @transform_8, window_bounds = array<i64: 1, 32, 128>}, {transform_indices = @transform_9, window_bounds = array<i64: 1, 1, 128>}, {transform_indices = @transform_10, window_bounds = array<i64: 1, 128, 32>}, {transform_indices = @transform_11, window_bounds = array<i64: 1, 1, 32>}, {pipeline_mode = #tpu.pipeline_mode<synchronous>, transform_indices = @transform_12, window_bounds = array<i64: 1, 32>}, {pipeline_mode = #tpu.pipeline_mode<synchronous>, transform_indices = @transform_13, window_bounds = array<i64: 1, 32>}, {transform_indices = @transform_14, window_bounds = array<i64: 16, 32>}]} {
    %c0_i32 = arith.constant 0 : i32
    %0 = arith.cmpi eq, %arg1, %c0_i32 : i32
    %1 = arith.extui %0 : i1 to i32
    %c0_i32_0 = arith.constant 0 : i32
    %2 = arith.cmpi ne, %1, %c0_i32_0 : i32
    scf.if %2 {
      %c0_82 = arith.constant 0 : index
      %c0_83 = arith.constant 0 : index
      %217 = vector.load %arg2[%c0_82, %c0_83] : memref<16x32xf32, #tpu.memory_space<vmem>>, vector<16x32xf32>
      %c0_84 = arith.constant 0 : index
      %c0_85 = arith.constant 0 : index
      %218 = vector.load %arg16[%c0_84, %c0_85] : memref<16x32xf32, #tpu.memory_space<vmem>>, vector<16x32xf32>
      tpu.vector_store %arg16[%c0_84, %c0_85], %217 {strides = array<i32>} : memref<16x32xf32, #tpu.memory_space<vmem>>, vector<16x32xf32>,
    } else {
    }
    %c0 = arith.constant 0 : index
    %c0_1 = arith.constant 0 : index
    %3 = vector.load %arg16[%c0, %c0_1] : memref<16x32xf32, #tpu.memory_space<vmem>>, vector<16x32xf32>
    %c0_2 = arith.constant 0 : index
    %c0_3 = arith.constant 0 : index
    %c0_4 = arith.constant 0 : index
    %4 = vector.load %arg6[%c0_2, %c0_3, %c0_4] : memref<1x1x32xf32, #tpu.memory_space<vmem>>, vector<1x1x32xf32>
    %5 = vector.shape_cast %4 : vector<1x1x32xf32> to vector<1x32xf32>
    %c0_5 = arith.constant 0 : index
    %c0_6 = arith.constant 0 : index
    %c0_7 = arith.constant 0 : index
    %6 = vector.load %arg7[%c0_5, %c0_6, %c0_7] : memref<1x1x32xf32, #tpu.memory_space<vmem>>, vector<1x1x32xf32>
    %7 = vector.shape_cast %6 : vector<1x1x32xf32> to vector<1x32xf32>
    %cst = arith.constant dense<0.000000e+00> : vector<16xf32>
    %8 = vector.multi_reduction <add>, %3, %cst [1] : vector<16x32xf32> to vector<16xf32>
    %9 = vector.shape_cast %8 : vector<16xf32> to vector<16x1xf32>
    %cst_8 = arith.constant 3.200000e+01 : f32
    %10 = vector.broadcast %cst_8 : f32 to vector<16x1xf32>
    %11 = arith.divf %9, %10 : vector<16x1xf32>
    %12 = vector.broadcast %11 : vector<16x1xf32> to vector<16x32xf32>
    %13 = arith.subf %3, %12 : vector<16x32xf32>
    %14 = arith.mulf %13, %13 : vector<16x32xf32>
    %cst_9 = arith.constant dense<0.000000e+00> : vector<16xf32>
    %15 = vector.multi_reduction <add>, %14, %cst_9 [1] : vector<16x32xf32> to vector<16xf32>
    %16 = vector.shape_cast %15 : vector<16xf32> to vector<16x1xf32>
    %cst_10 = arith.constant 3.200000e+01 : f32
    %17 = vector.broadcast %cst_10 : f32 to vector<16x1xf32>
    %18 = arith.divf %16, %17 : vector<16x1xf32>
    %19 = vector.broadcast %11 : vector<16x1xf32> to vector<16x32xf32>
    %20 = arith.subf %3, %19 : vector<16x32xf32>
    %cst_11 = arith.constant 9.99999974E-6 : f32
    %21 = vector.broadcast %cst_11 : f32 to vector<16x1xf32>
    %22 = arith.addf %18, %21 : vector<16x1xf32>
    %23 = math.rsqrt %22 : vector<16x1xf32>
    %24 = vector.broadcast %23 : vector<16x1xf32> to vector<16x32xf32>
    %25 = arith.mulf %20, %24 : vector<16x32xf32>
    %26 = vector.broadcast %5 : vector<1x32xf32> to vector<16x32xf32>
    %27 = arith.mulf %25, %26 : vector<16x32xf32>
    %28 = vector.broadcast %7 : vector<1x32xf32> to vector<16x32xf32>
    %29 = arith.addf %27, %28 : vector<16x32xf32>
    %30 = arith.truncf %29 : vector<16x32xf32> to vector<16x32xbf16>
    %c0_12 = arith.constant 0 : index
    %c0_13 = arith.constant 0 : index
    %c0_14 = arith.constant 0 : index
    %31 = vector.load %arg3[%c0_12, %c0_13, %c0_14] : memref<1x32x96xbf16, #tpu.memory_space<vmem>>, vector<1x32x96xbf16>
    %32 = vector.shape_cast %31 : vector<1x32x96xbf16> to vector<32x96xbf16>
    %cst_15 = arith.constant dense<0.000000e+00> : vector<16x96xf32>
    %33 = tpu.matmul %30, %32, %cst_15 {dimension_numbers = #tpu.dot_dimension_numbers<[1], [0], [0], [1], [0, 0, 1, 1], [], []>} : vector<16x32xbf16>, vector<32x96xbf16>, vector<16x96xf32> -> vector<16x96xf32>
    %34 = tpu.iota {dimensions = array<i32: 0>} : vector<8x8xi32>
    %35 = tpu.iota {dimensions = array<i32: 1>} : vector<8x8xi32>
    %36 = arith.cmpi sle, %35, %34 : vector<8x8xi32>
    %cst_16 = arith.constant 0.000000e+00 : f32
    %cst_17 = arith.constant -1.000000e+30 : f32
    %37 = vector.broadcast %cst_16 : f32 to vector<8x8xf32>
    %38 = vector.broadcast %cst_17 : f32 to vector<8x8xf32>
    %39 = arith.select %36, %37, %38 : vector<8x8xi1>, vector<8x8xf32>
    %40 = vector.extract_strided_slice %33 {offsets = [0, 0], sizes = [16, 8], strides = [1, 1]} : vector<16x96xf32> to vector<16x8xf32>
    %41 = vector.shape_cast %40 : vector<16x8xf32> to vector<2x8x8xf32>
    %42 = arith.truncf %41 : vector<2x8x8xf32> to vector<2x8x8xbf16>
    %43 = vector.extract_strided_slice %33 {offsets = [0, 32], sizes = [16, 8], strides = [1, 1]} : vector<16x96xf32> to vector<16x8xf32>
    %44 = vector.shape_cast %43 : vector<16x8xf32> to vector<2x8x8xf32>
    %45 = arith.truncf %44 : vector<2x8x8xf32> to vector<2x8x8xbf16>
    %46 = vector.extract_strided_slice %33 {offsets = [0, 64], sizes = [16, 8], strides = [1, 1]} : vector<16x96xf32> to vector<16x8xf32>
    %47 = vector.shape_cast %46 : vector<16x8xf32> to vector<2x8x8xf32>
    %48 = arith.truncf %47 : vector<2x8x8xf32> to vector<2x8x8xbf16>
    "tpu.trace_start"() <{level = 10 : i32, message = "bqd,bkd->bqk"}> : () -> ()
    %cst_18 = arith.constant dense<0.000000e+00> : vector<2x8x8xf32>
    %49 = tpu.matmul %42, %45, %cst_18 {dimension_numbers = #tpu.dot_dimension_numbers<[2], [2], [1], [1], [0, 0, 0, 1, 1, 1], [0], [0]>} : vector<2x8x8xbf16>, vector<2x8x8xbf16>, vector<2x8x8xf32> -> vector<2x8x8xf32>
    "tpu.trace_stop"() : () -> ()
    %cst_19 = arith.constant 0.353553385 : f32
    %50 = vector.broadcast %cst_19 : f32 to vector<2x8x8xf32>
    %51 = arith.mulf %49, %50 : vector<2x8x8xf32>
    %52 = vector.shape_cast %39 : vector<8x8xf32> to vector<1x8x8xf32>
    %53 = vector.broadcast %52 : vector<1x8x8xf32> to vector<2x8x8xf32>
    %54 = arith.addf %51, %53 : vector<2x8x8xf32>
    %cst_20 = arith.constant dense<0xFF800000> : vector<2x8xf32>
    %55 = vector.multi_reduction <maximumf>, %54, %cst_20 [2] : vector<2x8x8xf32> to vector<2x8xf32>
    %56 = vector.shape_cast %55 : vector<2x8xf32> to vector<2x8x1xf32>
    %57 = vector.broadcast %56 : vector<2x8x1xf32> to vector<2x8x8xf32>
    %58 = arith.subf %54, %57 : vector<2x8x8xf32>
    %59 = math.exp %58 : vector<2x8x8xf32>
    %cst_21 = arith.constant dense<0.000000e+00> : vector<2x8xf32>
    %60 = vector.multi_reduction <add>, %59, %cst_21 [2] : vector<2x8x8xf32> to vector<2x8xf32>
    %61 = vector.shape_cast %60 : vector<2x8xf32> to vector<2x8x1xf32>
    %62 = tpu.reciprocal %61 {approx = true} : vector<2x8x1xf32> -> vector<2x8x1xf32>
    %63 = vector.broadcast %62 : vector<2x8x1xf32> to vector<2x8x8xf32>
    %64 = arith.mulf %59, %63 : vector<2x8x8xf32>
    %65 = arith.truncf %64 : vector<2x8x8xf32> to vector<2x8x8xbf16>
    "tpu.trace_start"() <{level = 10 : i32, message = "bqk,bkd->bqd"}> : () -> ()
    %cst_22 = arith.constant dense<0.000000e+00> : vector<2x8x8xf32>
    %66 = tpu.matmul %65, %48, %cst_22 {dimension_numbers = #tpu.dot_dimension_numbers<[2], [1], [1], [2], [0, 0, 0, 1, 1, 2], [0], [0]>} : vector<2x8x8xbf16>, vector<2x8x8xbf16>, vector<2x8x8xf32> -> vector<2x8x8xf32>
    "tpu.trace_stop"() : () -> ()
    %67 = vector.shape_cast %66 : vector<2x8x8xf32> to vector<16x8xf32>
    %c0_23 = arith.constant 0 : index
    %c0_24 = arith.constant 0 : index
    %68 = vector.load %arg17[%c0_23, %c0_24] : memref<16x32xf32, #tpu.memory_space<vmem>>, vector<16x8xf32>
    tpu.vector_store %arg17[%c0_23, %c0_24], %67 {strides = array<i32>} : memref<16x32xf32, #tpu.memory_space<vmem>>, vector<16x8xf32>,
    %69 = vector.extract_strided_slice %33 {offsets = [0, 8], sizes = [16, 8], strides = [1, 1]} : vector<16x96xf32> to vector<16x8xf32>
    %70 = vector.shape_cast %69 : vector<16x8xf32> to vector<2x8x8xf32>
    %71 = arith.truncf %70 : vector<2x8x8xf32> to vector<2x8x8xbf16>
    %72 = vector.extract_strided_slice %33 {offsets = [0, 40], sizes = [16, 8], strides = [1, 1]} : vector<16x96xf32> to vector<16x8xf32>
    %73 = vector.shape_cast %72 : vector<16x8xf32> to vector<2x8x8xf32>
    %74 = arith.truncf %73 : vector<2x8x8xf32> to vector<2x8x8xbf16>
    %75 = vector.extract_strided_slice %33 {offsets = [0, 72], sizes = [16, 8], strides = [1, 1]} : vector<16x96xf32> to vector<16x8xf32>
    %76 = vector.shape_cast %75 : vector<16x8xf32> to vector<2x8x8xf32>
    %77 = arith.truncf %76 : vector<2x8x8xf32> to vector<2x8x8xbf16>
    "tpu.trace_start"() <{level = 10 : i32, message = "bqd,bkd->bqk"}> : () -> ()
    %cst_25 = arith.constant dense<0.000000e+00> : vector<2x8x8xf32>
    %78 = tpu.matmul %71, %74, %cst_25 {dimension_numbers = #tpu.dot_dimension_numbers<[2], [2], [1], [1], [0, 0, 0, 1, 1, 1], [0], [0]>} : vector<2x8x8xbf16>, vector<2x8x8xbf16>, vector<2x8x8xf32> -> vector<2x8x8xf32>
    "tpu.trace_stop"() : () -> ()
    %cst_26 = arith.constant 0.353553385 : f32
    %79 = vector.broadcast %cst_26 : f32 to vector<2x8x8xf32>
    %80 = arith.mulf %78, %79 : vector<2x8x8xf32>
    %81 = vector.shape_cast %39 : vector<8x8xf32> to vector<1x8x8xf32>
    %82 = vector.broadcast %81 : vector<1x8x8xf32> to vector<2x8x8xf32>
    %83 = arith.addf %80, %82 : vector<2x8x8xf32>
    %cst_27 = arith.constant dense<0xFF800000> : vector<2x8xf32>
    %84 = vector.multi_reduction <maximumf>, %83, %cst_27 [2] : vector<2x8x8xf32> to vector<2x8xf32>
    %85 = vector.shape_cast %84 : vector<2x8xf32> to vector<2x8x1xf32>
    %86 = vector.broadcast %85 : vector<2x8x1xf32> to vector<2x8x8xf32>
    %87 = arith.subf %83, %86 : vector<2x8x8xf32>
    %88 = math.exp %87 : vector<2x8x8xf32>
    %cst_28 = arith.constant dense<0.000000e+00> : vector<2x8xf32>
    %89 = vector.multi_reduction <add>, %88, %cst_28 [2] : vector<2x8x8xf32> to vector<2x8xf32>
    %90 = vector.shape_cast %89 : vector<2x8xf32> to vector<2x8x1xf32>
    %91 = tpu.reciprocal %90 {approx = true} : vector<2x8x1xf32> -> vector<2x8x1xf32>
    %92 = vector.broadcast %91 : vector<2x8x1xf32> to vector<2x8x8xf32>
    %93 = arith.mulf %88, %92 : vector<2x8x8xf32>
    %94 = arith.truncf %93 : vector<2x8x8xf32> to vector<2x8x8xbf16>
    "tpu.trace_start"() <{level = 10 : i32, message = "bqk,bkd->bqd"}> : () -> ()
    %cst_29 = arith.constant dense<0.000000e+00> : vector<2x8x8xf32>
    %95 = tpu.matmul %94, %77, %cst_29 {dimension_numbers = #tpu.dot_dimension_numbers<[2], [1], [1], [2], [0, 0, 0, 1, 1, 2], [0], [0]>} : vector<2x8x8xbf16>, vector<2x8x8xbf16>, vector<2x8x8xf32> -> vector<2x8x8xf32>
    "tpu.trace_stop"() : () -> ()
    %96 = vector.shape_cast %95 : vector<2x8x8xf32> to vector<16x8xf32>
    %c0_30 = arith.constant 0 : index
    %c8 = arith.constant 8 : index
    %97 = vector.load %arg17[%c0_30, %c8] : memref<16x32xf32, #tpu.memory_space<vmem>>, vector<16x8xf32>
    tpu.vector_store %arg17[%c0_30, %c8], %96 {strides = array<i32>} : memref<16x32xf32, #tpu.memory_space<vmem>>, vector<16x8xf32>,
    %98 = vector.extract_strided_slice %33 {offsets = [0, 16], sizes = [16, 8], strides = [1, 1]} : vector<16x96xf32> to vector<16x8xf32>
    %99 = vector.shape_cast %98 : vector<16x8xf32> to vector<2x8x8xf32>
    %100 = arith.truncf %99 : vector<2x8x8xf32> to vector<2x8x8xbf16>
    %101 = vector.extract_strided_slice %33 {offsets = [0, 48], sizes = [16, 8], strides = [1, 1]} : vector<16x96xf32> to vector<16x8xf32>
    %102 = vector.shape_cast %101 : vector<16x8xf32> to vector<2x8x8xf32>
    %103 = arith.truncf %102 : vector<2x8x8xf32> to vector<2x8x8xbf16>
    %104 = vector.extract_strided_slice %33 {offsets = [0, 80], sizes = [16, 8], strides = [1, 1]} : vector<16x96xf32> to vector<16x8xf32>
    %105 = vector.shape_cast %104 : vector<16x8xf32> to vector<2x8x8xf32>
    %106 = arith.truncf %105 : vector<2x8x8xf32> to vector<2x8x8xbf16>
    "tpu.trace_start"() <{level = 10 : i32, message = "bqd,bkd->bqk"}> : () -> ()
    %cst_31 = arith.constant dense<0.000000e+00> : vector<2x8x8xf32>
    %107 = tpu.matmul %100, %103, %cst_31 {dimension_numbers = #tpu.dot_dimension_numbers<[2], [2], [1], [1], [0, 0, 0, 1, 1, 1], [0], [0]>} : vector<2x8x8xbf16>, vector<2x8x8xbf16>, vector<2x8x8xf32> -> vector<2x8x8xf32>
    "tpu.trace_stop"() : () -> ()
    %cst_32 = arith.constant 0.353553385 : f32
    %108 = vector.broadcast %cst_32 : f32 to vector<2x8x8xf32>
    %109 = arith.mulf %107, %108 : vector<2x8x8xf32>
    %110 = vector.shape_cast %39 : vector<8x8xf32> to vector<1x8x8xf32>
    %111 = vector.broadcast %110 : vector<1x8x8xf32> to vector<2x8x8xf32>
    %112 = arith.addf %109, %111 : vector<2x8x8xf32>
    %cst_33 = arith.constant dense<0xFF800000> : vector<2x8xf32>
    %113 = vector.multi_reduction <maximumf>, %112, %cst_33 [2] : vector<2x8x8xf32> to vector<2x8xf32>
    %114 = vector.shape_cast %113 : vector<2x8xf32> to vector<2x8x1xf32>
    %115 = vector.broadcast %114 : vector<2x8x1xf32> to vector<2x8x8xf32>
    %116 = arith.subf %112, %115 : vector<2x8x8xf32>
    %117 = math.exp %116 : vector<2x8x8xf32>
    %cst_34 = arith.constant dense<0.000000e+00> : vector<2x8xf32>
    %118 = vector.multi_reduction <add>, %117, %cst_34 [2] : vector<2x8x8xf32> to vector<2x8xf32>
    %119 = vector.shape_cast %118 : vector<2x8xf32> to vector<2x8x1xf32>
    %120 = tpu.reciprocal %119 {approx = true} : vector<2x8x1xf32> -> vector<2x8x1xf32>
    %121 = vector.broadcast %120 : vector<2x8x1xf32> to vector<2x8x8xf32>
    %122 = arith.mulf %117, %121 : vector<2x8x8xf32>
    %123 = arith.truncf %122 : vector<2x8x8xf32> to vector<2x8x8xbf16>
    "tpu.trace_start"() <{level = 10 : i32, message = "bqk,bkd->bqd"}> : () -> ()
    %cst_35 = arith.constant dense<0.000000e+00> : vector<2x8x8xf32>
    %124 = tpu.matmul %123, %106, %cst_35 {dimension_numbers = #tpu.dot_dimension_numbers<[2], [1], [1], [2], [0, 0, 0, 1, 1, 2], [0], [0]>} : vector<2x8x8xbf16>, vector<2x8x8xbf16>, vector<2x8x8xf32> -> vector<2x8x8xf32>
    "tpu.trace_stop"() : () -> ()
    %125 = vector.shape_cast %124 : vector<2x8x8xf32> to vector<16x8xf32>
    %c0_36 = arith.constant 0 : index
    %c16 = arith.constant 16 : index
    %126 = vector.load %arg17[%c0_36, %c16] : memref<16x32xf32, #tpu.memory_space<vmem>>, vector<16x8xf32>
    tpu.vector_store %arg17[%c0_36, %c16], %125 {strides = array<i32>} : memref<16x32xf32, #tpu.memory_space<vmem>>, vector<16x8xf32>,
    %127 = vector.extract_strided_slice %33 {offsets = [0, 24], sizes = [16, 8], strides = [1, 1]} : vector<16x96xf32> to vector<16x8xf32>
    %128 = vector.shape_cast %127 : vector<16x8xf32> to vector<2x8x8xf32>
    %129 = arith.truncf %128 : vector<2x8x8xf32> to vector<2x8x8xbf16>
    %130 = vector.extract_strided_slice %33 {offsets = [0, 56], sizes = [16, 8], strides = [1, 1]} : vector<16x96xf32> to vector<16x8xf32>
    %131 = vector.shape_cast %130 : vector<16x8xf32> to vector<2x8x8xf32>
    %132 = arith.truncf %131 : vector<2x8x8xf32> to vector<2x8x8xbf16>
    %133 = vector.extract_strided_slice %33 {offsets = [0, 88], sizes = [16, 8], strides = [1, 1]} : vector<16x96xf32> to vector<16x8xf32>
    %134 = vector.shape_cast %133 : vector<16x8xf32> to vector<2x8x8xf32>
    %135 = arith.truncf %134 : vector<2x8x8xf32> to vector<2x8x8xbf16>
    "tpu.trace_start"() <{level = 10 : i32, message = "bqd,bkd->bqk"}> : () -> ()
    %cst_37 = arith.constant dense<0.000000e+00> : vector<2x8x8xf32>
    %136 = tpu.matmul %129, %132, %cst_37 {dimension_numbers = #tpu.dot_dimension_numbers<[2], [2], [1], [1], [0, 0, 0, 1, 1, 1], [0], [0]>} : vector<2x8x8xbf16>, vector<2x8x8xbf16>, vector<2x8x8xf32> -> vector<2x8x8xf32>
    "tpu.trace_stop"() : () -> ()
    %cst_38 = arith.constant 0.353553385 : f32
    %137 = vector.broadcast %cst_38 : f32 to vector<2x8x8xf32>
    %138 = arith.mulf %136, %137 : vector<2x8x8xf32>
    %139 = vector.shape_cast %39 : vector<8x8xf32> to vector<1x8x8xf32>
    %140 = vector.broadcast %139 : vector<1x8x8xf32> to vector<2x8x8xf32>
    %141 = arith.addf %138, %140 : vector<2x8x8xf32>
    %cst_39 = arith.constant dense<0xFF800000> : vector<2x8xf32>
    %142 = vector.multi_reduction <maximumf>, %141, %cst_39 [2] : vector<2x8x8xf32> to vector<2x8xf32>
    %143 = vector.shape_cast %142 : vector<2x8xf32> to vector<2x8x1xf32>
    %144 = vector.broadcast %143 : vector<2x8x1xf32> to vector<2x8x8xf32>
    %145 = arith.subf %141, %144 : vector<2x8x8xf32>
    %146 = math.exp %145 : vector<2x8x8xf32>
    %cst_40 = arith.constant dense<0.000000e+00> : vector<2x8xf32>
    %147 = vector.multi_reduction <add>, %146, %cst_40 [2] : vector<2x8x8xf32> to vector<2x8xf32>
    %148 = vector.shape_cast %147 : vector<2x8xf32> to vector<2x8x1xf32>
    %149 = tpu.reciprocal %148 {approx = true} : vector<2x8x1xf32> -> vector<2x8x1xf32>
    %150 = vector.broadcast %149 : vector<2x8x1xf32> to vector<2x8x8xf32>
    %151 = arith.mulf %146, %150 : vector<2x8x8xf32>
    %152 = arith.truncf %151 : vector<2x8x8xf32> to vector<2x8x8xbf16>
    "tpu.trace_start"() <{level = 10 : i32, message = "bqk,bkd->bqd"}> : () -> ()
    %cst_41 = arith.constant dense<0.000000e+00> : vector<2x8x8xf32>
    %153 = tpu.matmul %152, %135, %cst_41 {dimension_numbers = #tpu.dot_dimension_numbers<[2], [1], [1], [2], [0, 0, 0, 1, 1, 2], [0], [0]>} : vector<2x8x8xbf16>, vector<2x8x8xbf16>, vector<2x8x8xf32> -> vector<2x8x8xf32>
    "tpu.trace_stop"() : () -> ()
    %154 = vector.shape_cast %153 : vector<2x8x8xf32> to vector<16x8xf32>
    %c0_42 = arith.constant 0 : index
    %c24 = arith.constant 24 : index
    %155 = vector.load %arg17[%c0_42, %c24] : memref<16x32xf32, #tpu.memory_space<vmem>>, vector<16x8xf32>
    tpu.vector_store %arg17[%c0_42, %c24], %154 {strides = array<i32>} : memref<16x32xf32, #tpu.memory_space<vmem>>, vector<16x8xf32>,
    %c0_43 = arith.constant 0 : index
    %c0_44 = arith.constant 0 : index
    %156 = vector.load %arg17[%c0_43, %c0_44] : memref<16x32xf32, #tpu.memory_space<vmem>>, vector<16x32xf32>
    %157 = arith.truncf %156 : vector<16x32xf32> to vector<16x32xbf16>
    %c0_45 = arith.constant 0 : index
    %c0_46 = arith.constant 0 : index
    %c0_47 = arith.constant 0 : index
    %158 = vector.load %arg4[%c0_45, %c0_46, %c0_47] : memref<1x32x32xbf16, #tpu.memory_space<vmem>>, vector<1x32x32xbf16>
    %159 = vector.shape_cast %158 : vector<1x32x32xbf16> to vector<32x32xbf16>
    %cst_48 = arith.constant dense<0.000000e+00> : vector<16x32xf32>
    %160 = tpu.matmul %157, %159, %cst_48 {dimension_numbers = #tpu.dot_dimension_numbers<[1], [0], [0], [1], [0, 0, 1, 1], [], []>} : vector<16x32xbf16>, vector<32x32xbf16>, vector<16x32xf32> -> vector<16x32xf32>
    %161 = arith.addf %3, %160 : vector<16x32xf32>
    %c0_49 = arith.constant 0 : index
    %c0_50 = arith.constant 0 : index
    %c0_51 = arith.constant 0 : index
    %162 = vector.load %arg5[%c0_49, %c0_50, %c0_51] : memref<1x1x32xf32, #tpu.memory_space<vmem>>, vector<1x1x32xf32>
    %163 = vector.shape_cast %162 : vector<1x1x32xf32> to vector<1x32xf32>
    %164 = vector.broadcast %163 : vector<1x32xf32> to vector<16x32xf32>
    %165 = arith.addf %161, %164 : vector<16x32xf32>
    %c0_52 = arith.constant 0 : index
    %c0_53 = arith.constant 0 : index
    %c0_54 = arith.constant 0 : index
    %166 = vector.load %arg8[%c0_52, %c0_53, %c0_54] : memref<1x1x32xf32, #tpu.memory_space<vmem>>, vector<1x1x32xf32>
    %167 = vector.shape_cast %166 : vector<1x1x32xf32> to vector<1x32xf32>
    %c0_55 = arith.constant 0 : index
    %c0_56 = arith.constant 0 : index
    %c0_57 = arith.constant 0 : index
    %168 = vector.load %arg9[%c0_55, %c0_56, %c0_57] : memref<1x1x32xf32, #tpu.memory_space<vmem>>, vector<1x1x32xf32>
    %169 = vector.shape_cast %168 : vector<1x1x32xf32> to vector<1x32xf32>
    %cst_58 = arith.constant dense<0.000000e+00> : vector<16xf32>
    %170 = vector.multi_reduction <add>, %165, %cst_58 [1] : vector<16x32xf32> to vector<16xf32>
    %171 = vector.shape_cast %170 : vector<16xf32> to vector<16x1xf32>
    %cst_59 = arith.constant 3.200000e+01 : f32
    %172 = vector.broadcast %cst_59 : f32 to vector<16x1xf32>
    %173 = arith.divf %171, %172 : vector<16x1xf32>
    %174 = vector.broadcast %173 : vector<16x1xf32> to vector<16x32xf32>
    %175 = arith.subf %165, %174 : vector<16x32xf32>
    %176 = arith.mulf %175, %175 : vector<16x32xf32>
    %cst_60 = arith.constant dense<0.000000e+00> : vector<16xf32>
    %177 = vector.multi_reduction <add>, %176, %cst_60 [1] : vector<16x32xf32> to vector<16xf32>
    %178 = vector.shape_cast %177 : vector<16xf32> to vector<16x1xf32>
    %cst_61 = arith.constant 3.200000e+01 : f32
    %179 = vector.broadcast %cst_61 : f32 to vector<16x1xf32>
    %180 = arith.divf %178, %179 : vector<16x1xf32>
    %181 = vector.broadcast %173 : vector<16x1xf32> to vector<16x32xf32>
    %182 = arith.subf %165, %181 : vector<16x32xf32>
    %cst_62 = arith.constant 9.99999974E-6 : f32
    %183 = vector.broadcast %cst_62 : f32 to vector<16x1xf32>
    %184 = arith.addf %180, %183 : vector<16x1xf32>
    %185 = math.rsqrt %184 : vector<16x1xf32>
    %186 = vector.broadcast %185 : vector<16x1xf32> to vector<16x32xf32>
    %187 = arith.mulf %182, %186 : vector<16x32xf32>
    %188 = vector.broadcast %167 : vector<1x32xf32> to vector<16x32xf32>
    %189 = arith.mulf %187, %188 : vector<16x32xf32>
    %190 = vector.broadcast %169 : vector<1x32xf32> to vector<16x32xf32>
    %191 = arith.addf %189, %190 : vector<16x32xf32>
    %192 = arith.truncf %191 : vector<16x32xf32> to vector<16x32xbf16>
    %cst_63 = arith.constant 0.000000e+00 : f32
    %193 = vector.broadcast %cst_63 : f32 to vector<16x32xf32>
    %c0_64 = arith.constant 0 : index
    %c0_65 = arith.constant 0 : index
    %c0_66 = arith.constant 0 : index
    %194 = vector.load %arg10[%c0_64, %c0_65, %c0_66] : memref<1x32x128xbf16, #tpu.memory_space<vmem>>, vector<1x32x128xbf16>
    %195 = vector.shape_cast %194 : vector<1x32x128xbf16> to vector<32x128xbf16>
    %cst_67 = arith.constant dense<0.000000e+00> : vector<16x128xf32>
    %196 = tpu.matmul %192, %195, %cst_67 {dimension_numbers = #tpu.dot_dimension_numbers<[1], [0], [0], [1], [0, 0, 1, 1], [], []>} : vector<16x32xbf16>, vector<32x128xbf16>, vector<16x128xf32> -> vector<16x128xf32>
    %c0_68 = arith.constant 0 : index
    %c0_69 = arith.constant 0 : index
    %c0_70 = arith.constant 0 : index
    %197 = vector.load %arg11[%c0_68, %c0_69, %c0_70] : memref<1x1x128xf32, #tpu.memory_space<vmem>>, vector<1x1x128xf32>
    %198 = vector.shape_cast %197 : vector<1x1x128xf32> to vector<1x128xf32>
    %199 = vector.broadcast %198 : vector<1x128xf32> to vector<16x128xf32>
    %200 = arith.addf %196, %199 : vector<16x128xf32>
    %cst_71 = arith.constant 0.000000e+00 : f32
    %201 = vector.broadcast %cst_71 : f32 to vector<16x128xf32>
    %202 = arith.maximumf %200, %201 : vector<16x128xf32>
    %203 = arith.truncf %202 : vector<16x128xf32> to vector<16x128xbf16>
    %c0_72 = arith.constant 0 : index
    %c0_73 = arith.constant 0 : index
    %c0_74 = arith.constant 0 : index
    %204 = vector.load %arg12[%c0_72, %c0_73, %c0_74] : memref<1x128x32xbf16, #tpu.memory_space<vmem>>, vector<1x128x32xbf16>
    %205 = vector.shape_cast %204 : vector<1x128x32xbf16> to vector<128x32xbf16>
    %cst_75 = arith.constant dense<0.000000e+00> : vector<16x32xf32>
    %206 = tpu.matmul %203, %205, %cst_75 {dimension_numbers = #tpu.dot_dimension_numbers<[1], [0], [0], [1], [0, 0, 1, 1], [], []>} : vector<16x128xbf16>, vector<128x32xbf16>, vector<16x32xf32> -> vector<16x32xf32>
    %207 = arith.addf %193, %206 : vector<16x32xf32>
    %208 = arith.addf %165, %207 : vector<16x32xf32>
    %c0_76 = arith.constant 0 : index
    %c0_77 = arith.constant 0 : index
    %c0_78 = arith.constant 0 : index
    %209 = vector.load %arg13[%c0_76, %c0_77, %c0_78] : memref<1x1x32xf32, #tpu.memory_space<vmem>>, vector<1x1x32xf32>
    %210 = vector.shape_cast %209 : vector<1x1x32xf32> to vector<1x32xf32>
    %211 = vector.broadcast %210 : vector<1x32xf32> to vector<16x32xf32>
    %212 = arith.addf %208, %211 : vector<16x32xf32>
    %c0_79 = arith.constant 0 : index
    %c0_80 = arith.constant 0 : index
    %213 = vector.load %arg16[%c0_79, %c0_80] : memref<16x32xf32, #tpu.memory_space<vmem>>, vector<16x32xf32>
    tpu.vector_store %arg16[%c0_79, %c0_80], %212 {strides = array<i32>} : memref<16x32xf32, #tpu.memory_space<vmem>>, vector<16x32xf32>,
    %c1_i32 = arith.constant 1 : i32
    %214 = arith.cmpi eq, %arg1, %c1_i32 : i32
    %215 = arith.extui %214 : i1 to i32
    %c0_i32_81 = arith.constant 0 : i32
    %216 = arith.cmpi ne, %215, %c0_i32_81 : i32
    scf.if %216 {
      %c0_82 = arith.constant 0 : index
      %c0_83 = arith.constant 0 : index
      %217 = vector.load %arg14[%c0_82, %c0_83] : memref<1x32xf32, #tpu.memory_space<vmem>>, vector<1x32xf32>
      %c0_84 = arith.constant 0 : index
      %c0_85 = arith.constant 0 : index
      %218 = vector.load %arg15[%c0_84, %c0_85] : memref<1x32xf32, #tpu.memory_space<vmem>>, vector<1x32xf32>
      %cst_86 = arith.constant dense<0.000000e+00> : vector<16xf32>
      %219 = vector.multi_reduction <add>, %212, %cst_86 [1] : vector<16x32xf32> to vector<16xf32>
      %220 = vector.shape_cast %219 : vector<16xf32> to vector<16x1xf32>
      %cst_87 = arith.constant 3.200000e+01 : f32
      %221 = vector.broadcast %cst_87 : f32 to vector<16x1xf32>
      %222 = arith.divf %220, %221 : vector<16x1xf32>
      %223 = vector.broadcast %222 : vector<16x1xf32> to vector<16x32xf32>
      %224 = arith.subf %212, %223 : vector<16x32xf32>
      %225 = arith.mulf %224, %224 : vector<16x32xf32>
      %cst_88 = arith.constant dense<0.000000e+00> : vector<16xf32>
      %226 = vector.multi_reduction <add>, %225, %cst_88 [1] : vector<16x32xf32> to vector<16xf32>
      %227 = vector.shape_cast %226 : vector<16xf32> to vector<16x1xf32>
      %cst_89 = arith.constant 3.200000e+01 : f32
      %228 = vector.broadcast %cst_89 : f32 to vector<16x1xf32>
      %229 = arith.divf %227, %228 : vector<16x1xf32>
      %230 = vector.broadcast %222 : vector<16x1xf32> to vector<16x32xf32>
      %231 = arith.subf %212, %230 : vector<16x32xf32>
      %cst_90 = arith.constant 9.99999974E-6 : f32
      %232 = vector.broadcast %cst_90 : f32 to vector<16x1xf32>
      %233 = arith.addf %229, %232 : vector<16x1xf32>
      %234 = math.rsqrt %233 : vector<16x1xf32>
      %235 = vector.broadcast %234 : vector<16x1xf32> to vector<16x32xf32>
      %236 = arith.mulf %231, %235 : vector<16x32xf32>
      %237 = vector.broadcast %217 : vector<1x32xf32> to vector<16x32xf32>
      %238 = arith.mulf %236, %237 : vector<16x32xf32>
      %239 = vector.broadcast %218 : vector<1x32xf32> to vector<16x32xf32>
      %240 = arith.addf %238, %239 : vector<16x32xf32>
      %c0_91 = arith.constant 0 : index
      %c0_92 = arith.constant 0 : index
      %241 = vector.load %arg16[%c0_91, %c0_92] : memref<16x32xf32, #tpu.memory_space<vmem>>, vector<16x32xf32>
      tpu.vector_store %arg16[%c0_91, %c0_92], %240 {strides = array<i32>} : memref<16x32xf32, #tpu.memory_space<vmem>>, vector<16x32xf32>,
    } else {
    }
    return
  }
  func.func @transform_0(%arg0: i32, %arg1: i32) -> (i32, i32) {
    %c0_i32 = arith.constant 0 : i32
    %c0_i32_0 = arith.constant 0 : i32
    return %arg0, %c0_i32 : i32, i32
  }
  func.func @transform_1(%arg0: i32, %arg1: i32) -> (i32, i32, i32) {
    %c0_i32 = arith.constant 0 : i32
    %c0_i32_0 = arith.constant 0 : i32
    %c0_i32_1 = arith.constant 0 : i32
    return %arg1, %c0_i32, %c0_i32_0 : i32, i32, i32
  }
  func.func @transform_2(%arg0: i32, %arg1: i32) -> (i32, i32, i32) {
    %c0_i32 = arith.constant 0 : i32
    %c0_i32_0 = arith.constant 0 : i32
    %c0_i32_1 = arith.constant 0 : i32
    return %arg1, %c0_i32, %c0_i32_0 : i32, i32, i32
  }
  func.func @transform_3(%arg0: i32, %arg1: i32) -> (i32, i32, i32) {
    %c0_i32 = arith.constant 0 : i32
    %c0_i32_0 = arith.constant 0 : i32
    %c0_i32_1 = arith.constant 0 : i32
    return %arg1, %c0_i32, %c0_i32_0 : i32, i32, i32
  }
  func.func @transform_4(%arg0: i32, %arg1: i32) -> (i32, i32, i32) {
    %c0_i32 = arith.constant 0 : i32
    %c0_i32_0 = arith.constant 0 : i32
    %c0_i32_1 = arith.constant 0 : i32
    return %arg1, %c0_i32, %c0_i32_0 : i32, i32, i32
  }
  func.func @transform_5(%arg0: i32, %arg1: i32) -> (i32, i32, i32) {
    %c0_i32 = arith.constant 0 : i32
    %c0_i32_0 = arith.constant 0 : i32
    %c0_i32_1 = arith.constant 0 : i32
    return %arg1, %c0_i32, %c0_i32_0 : i32, i32, i32
  }
  func.func @transform_6(%arg0: i32, %arg1: i32) -> (i32, i32, i32) {
    %c0_i32 = arith.constant 0 : i32
    %c0_i32_0 = arith.constant 0 : i32
    %c0_i32_1 = arith.constant 0 : i32
    return %arg1, %c0_i32, %c0_i32_0 : i32, i32, i32
  }
  func.func @transform_7(%arg0: i32, %arg1: i32) -> (i32, i32, i32) {
    %c0_i32 = arith.constant 0 : i32
    %c0_i32_0 = arith.constant 0 : i32
    %c0_i32_1 = arith.constant 0 : i32
    return %arg1, %c0_i32, %c0_i32_0 : i32, i32, i32
  }
  func.func @transform_8(%arg0: i32, %arg1: i32) -> (i32, i32, i32) {
    %c0_i32 = arith.constant 0 : i32
    %c0_i32_0 = arith.constant 0 : i32
    %c0_i32_1 = arith.constant 0 : i32
    return %arg1, %c0_i32, %c0_i32_0 : i32, i32, i32
  }
  func.func @transform_9(%arg0: i32, %arg1: i32) -> (i32, i32, i32) {
    %c0_i32 = arith.constant 0 : i32
    %c0_i32_0 = arith.constant 0 : i32
    %c0_i32_1 = arith.constant 0 : i32
    return %arg1, %c0_i32, %c0_i32_0 : i32, i32, i32
  }
  func.func @transform_10(%arg0: i32, %arg1: i32) -> (i32, i32, i32) {
    %c0_i32 = arith.constant 0 : i32
    %c0_i32_0 = arith.constant 0 : i32
    %c0_i32_1 = arith.constant 0 : i32
    return %arg1, %c0_i32, %c0_i32_0 : i32, i32, i32
  }
  func.func @transform_11(%arg0: i32, %arg1: i32) -> (i32, i32, i32) {
    %c0_i32 = arith.constant 0 : i32
    %c0_i32_0 = arith.constant 0 : i32
    %c0_i32_1 = arith.constant 0 : i32
    return %arg1, %c0_i32, %c0_i32_0 : i32, i32, i32
  }
  func.func @transform_12(%arg0: i32, %arg1: i32) -> (i32, i32) {
    %c0_i32 = arith.constant 0 : i32
    %c0_i32_0 = arith.constant 0 : i32
    %c0_i32_1 = arith.constant 0 : i32
    return %c0_i32, %c0_i32_0 : i32, i32
  }
  func.func @transform_13(%arg0: i32, %arg1: i32) -> (i32, i32) {
    %c0_i32 = arith.constant 0 : i32
    %c0_i32_0 = arith.constant 0 : i32
    %c0_i32_1 = arith.constant 0 : i32
    return %c0_i32, %c0_i32_0 : i32, i32
  }
  func.func @transform_14(%arg0: i32, %arg1: i32) -> (i32, i32) {
    %c0_i32 = arith.constant 0 : i32
    %c0_i32_0 = arith.constant 0 : i32
    return %arg0, %c0_i32 : i32, i32
  }
}

</mosaic_0001>

<llo_original>
// kernel: tpu_custom_call.1
$region0: #{tpu_custom_call.1}
  #allocation0 [shape = 'u32[]', space=smem, size = 0x4, offset = 0x4, fixed_abs, tag = 'smem constant byte address 0x4 - core index']
  #allocation1 [shape = 'u32[72,128]{1,0:T(1,128)}', space=vmem, size = 0x9000, scoped, tag = 'internal scratch']
  #allocation2 [shape = 'f32[16,32]{1,0:T(8,128)}', space=vmem, size = 0x2000, scoped, tag = 'scratch operand']
  %s0 = inlined_call_operand.vmem [shape: f32[16,32], index: 0, kind: input, shape index: {}]
  %s1 = inlined_call_operand.vmem [shape: bf16[2,32,96], index: 1, kind: input, shape index: {}]
  %s2 = inlined_call_operand.vmem [shape: bf16[2,32,32], index: 2, kind: input, shape index: {}]
  %s3 = inlined_call_operand.vmem [shape: f32[2,1,32], index: 3, kind: input, shape index: {}]
  %s4 = inlined_call_operand.vmem [shape: f32[2,1,32], index: 4, kind: input, shape index: {}]
  %s5 = inlined_call_operand.vmem [shape: f32[2,1,32], index: 5, kind: input, shape index: {}]
  %s6 = inlined_call_operand.vmem [shape: f32[2,1,32], index: 6, kind: input, shape index: {}]
  %s7 = inlined_call_operand.vmem [shape: f32[2,1,32], index: 7, kind: input, shape index: {}]
  %s8 = inlined_call_operand.vmem [shape: bf16[2,32,128], index: 8, kind: input, shape index: {}]
  %s9 = inlined_call_operand.vmem [shape: f32[2,1,128], index: 9, kind: input, shape index: {}]
  %s10 = inlined_call_operand.vmem [shape: bf16[2,128,32], index: 10, kind: input, shape index: {}]
  %s11 = inlined_call_operand.vmem [shape: f32[2,1,32], index: 11, kind: input, shape index: {}]
  %s12 = inlined_call_operand.vmem [shape: f32[1,32], index: 12, kind: input, shape index: {}]
  %s13 = inlined_call_operand.vmem [shape: f32[1,32], index: 13, kind: input, shape index: {}]
  %s14 = inlined_call_operand.hbm [shape: f32[16,32], index: 14, kind: output, shape index: {}]
  %s15 = sld [smem:[#allocation0]]
  $region97: #{tpu_custom_call.1} parent=0
    _
  %s17 = ssub.s32 1, %s15
  %s18 = scalar_select 0, %s17, %s15
  $region1: #{tpu_custom_call.1} parent=0
    #allocation3 [shape = 'u8[8192]{0}', space=vmem, size = 0x2000, scoped, tag = 'output window, operand 0, single buffered']
    #allocation4 [shape = 's32[2]{0}', space=sflag, size = 0x8, scoped, tag = 'scoped memory for tpu_custom_call.1']
    %19 = vsyncpa [#allocation4], 0
    loop: start=0, step=1, limit=4
    $region2: #{tpu_custom_call.1} parent=1 // loop_pre_header
      _
    $region3: #{tpu_custom_call.1} parent=1 // loop_header
      %s21 = sphi 0, %s25
      %p22 = scmp.ge.s32.totalorder %s21, 4
      %s28 = sphi 0, %s40
      %s29 = sphi 0, %s36
      %s30 = sphi 0, %s28
      %s31 = sphi 0, %s29
      %s32 = sphi 0, %s30
      %s33 = sphi 0, %s31
      %s43 = sphi 0, %s45
      %s46 = sphi 0, %s43
      %s47 = sphi 0, %s46
      %s63 = sphi 0, %s47
      %s69 = sphi 0, %s71
      %s72 = sphi 0, %s69
      %s73 = sphi 0, %s72
      %s89 = sphi 0, %s73
      %s95 = sphi 0, %s97
      %s98 = sphi 0, %s95
      %s99 = sphi 0, %s98
      %s115 = sphi 0, %s99
      %s121 = sphi 0, %s123
      %s124 = sphi 0, %s121
      %s125 = sphi 0, %s124
      %s141 = sphi 0, %s125
      %s147 = sphi 0, %s149
      %s150 = sphi 0, %s147
      %s151 = sphi 0, %s150
      %s167 = sphi 0, %s151
      %s173 = sphi 0, %s175
      %s176 = sphi 0, %s173
      %s177 = sphi 0, %s176
      %s193 = sphi 0, %s177
      %s199 = sphi 0, %s201
      %s202 = sphi 0, %s199
      %s203 = sphi 0, %s202
      %s219 = sphi 0, %s203
      %s225 = sphi 0, %s227
      %s228 = sphi 0, %s225
      %s229 = sphi 0, %s228
      %s245 = sphi 0, %s229
      %s251 = sphi 0, %s253
      %s254 = sphi 0, %s251
      %s255 = sphi 0, %s254
      %s271 = sphi 0, %s255
      %s277 = sphi 0, %s279
      %s280 = sphi 0, %s277
      %s281 = sphi 0, %s280
      %s297 = sphi 0, %s281
      %s303 = sphi 0, %s305
      %s306 = sphi 0, %s303
      %s307 = sphi 0, %s306
      %s323 = sphi 0, %s307
      %s329 = sphi 0, %s331
      %s332 = sphi 0, %s329
      %s333 = sphi 0, %s332
      %s349 = sphi 0, %s333
      %s353 = sphi 0, %s353
      %s355 = sphi 0, %s353
      %s356 = sphi 0, %s355
      %s370 = sphi 0, %s356
      %s374 = sphi 0, %s374
      %s376 = sphi 0, %s374
      %s377 = sphi 0, %s376
      %s391 = sphi 0, %s377
      %s397 = sphi 0, %s399
      %s400 = sphi 0, %s397
      %s401 = sphi 0, %s400
      %s417 = sphi 0, %s401
    $region4: #{tpu_custom_call.1} parent=1 // loop_header_branch
      %24 = sbr.rel (%p22) target = $region8
    $region5: #{tpu_custom_call.1} parent=1 // loop_body
      %s26 = ssub.s32 %s21, 1
      %s27 = ssub.s32 %s21, 2
      %s34 = sadd.s32 1, %s29
      %p35 = scmp.ge.s32.totalorder %s34, 2
      %s36 = scalar_select %p35, 0, %s34
      %s37 = sadd.s32 1, %s28
      %s38 = scalar_select %p35, %s37, %s28
      %p39 = scmp.ge.s32.totalorder %s38, 1
      %s40 = scalar_select %p39, 0, %s38
      %s41 = ssub.s32 %s28, %s40
      %p42 = scmp.eq.s32.totalorder %s41, 0
      %s44 = sadd.s32 %s43, 1
      %s45 = scalar_select %p42, %s43, %s44
      %p48 = pneg %p42
      %p49 = scmp.eq.s32.totalorder %s21, 1
      %p50 = por %p48, %p49
      %p51 = scmp.ne.s32.totalorder %s43, %s46
      %p52 = scmp.eq.s32.totalorder %s21, 0
      %p53 = por %p51, %p52
      %p54 = scmp.ne.s32.totalorder %s43, %s46
      %p55 = scmp.eq.s32.totalorder %s26, 1
      %p56 = por %p54, %p55
      %p57 = scmp.ne.s32.totalorder %s46, %s47
      %p58 = scmp.eq.s32.totalorder %s26, 0
      %p59 = por %p57, %p58
      %p60 = scmp.ne.s32.totalorder %s46, %s47
      %p61 = scmp.eq.s32.totalorder %s27, 1
      %p62 = por %p60, %p61
      %p64 = scmp.ne.s32.totalorder %s47, %s63
      %p65 = scmp.eq.s32.totalorder %s27, 0
      %p66 = por %p64, %p65
      %s67 = ssub.s32 %s29, %s36
      %p68 = scmp.eq.s32.totalorder %s67, 0
      %s70 = sadd.s32 %s69, 1
      %s71 = scalar_select %p68, %s69, %s70
      %p74 = pneg %p68
      %p75 = scmp.eq.s32.totalorder %s21, 1
      %p76 = por %p74, %p75
      %p77 = scmp.ne.s32.totalorder %s69, %s72
      %p78 = scmp.eq.s32.totalorder %s21, 0
      %p79 = por %p77, %p78
      %p80 = scmp.ne.s32.totalorder %s69, %s72
      %p81 = scmp.eq.s32.totalorder %s26, 1
      %p82 = por %p80, %p81
      %p83 = scmp.ne.s32.totalorder %s72, %s73
      %p84 = scmp.eq.s32.totalorder %s26, 0
      %p85 = por %p83, %p84
      %p86 = scmp.ne.s32.totalorder %s72, %s73
      %p87 = scmp.eq.s32.totalorder %s27, 1
      %p88 = por %p86, %p87
      %p90 = scmp.ne.s32.totalorder %s73, %s89
      %p91 = scmp.eq.s32.totalorder %s27, 0
      %p92 = por %p90, %p91
      %s93 = ssub.s32 %s29, %s36
      %p94 = scmp.eq.s32.totalorder %s93, 0
      %s96 = sadd.s32 %s95, 1
      %s97 = scalar_select %p94, %s95, %s96
      %p100 = pneg %p94
      %p101 = scmp.eq.s32.totalorder %s21, 1
      %p102 = por %p100, %p101
      %p103 = scmp.ne.s32.totalorder %s95, %s98
      %p104 = scmp.eq.s32.totalorder %s21, 0
      %p105 = por %p103, %p104
      %p106 = scmp.ne.s32.totalorder %s95, %s98
      %p107 = scmp.eq.s32.totalorder %s26, 1
      %p108 = por %p106, %p107
      %p109 = scmp.ne.s32.totalorder %s98, %s99
      %p110 = scmp.eq.s32.totalorder %s26, 0
      %p111 = por %p109, %p110
      %p112 = scmp.ne.s32.totalorder %s98, %s99
      %p113 = scmp.eq.s32.totalorder %s27, 1
      %p114 = por %p112, %p113
      %p116 = scmp.ne.s32.totalorder %s99, %s115
      %p117 = scmp.eq.s32.totalorder %s27, 0
      %p118 = por %p116, %p117
      %s119 = ssub.s32 %s29, %s36
      %p120 = scmp.eq.s32.totalorder %s119, 0
      %s122 = sadd.s32 %s121, 1
      %s123 = scalar_select %p120, %s121, %s122
      %p126 = pneg %p120
      %p127 = scmp.eq.s32.totalorder %s21, 1
      %p128 = por %p126, %p127
      %p129 = scmp.ne.s32.totalorder %s121, %s124
      %p130 = scmp.eq.s32.totalorder %s21, 0
      %p131 = por %p129, %p130
      %p132 = scmp.ne.s32.totalorder %s121, %s124
      %p133 = scmp.eq.s32.totalorder %s26, 1
      %p134 = por %p132, %p133
      %p135 = scmp.ne.s32.totalorder %s124, %s125
      %p136 = scmp.eq.s32.totalorder %s26, 0
      %p137 = por %p135, %p136
      %p138 = scmp.ne.s32.totalorder %s124, %s125
      %p139 = scmp.eq.s32.totalorder %s27, 1
      %p140 = por %p138, %p139
      %p142 = scmp.ne.s32.totalorder %s125, %s141
      %p143 = scmp.eq.s32.totalorder %s27, 0
      %p144 = por %p142, %p143
      %s145 = ssub.s32 %s29, %s36
      %p146 = scmp.eq.s32.totalorder %s145, 0
      %s148 = sadd.s32 %s147, 1
      %s149 = scalar_select %p146, %s147, %s148
      %p152 = pneg %p146
      %p153 = scmp.eq.s32.totalorder %s21, 1
      %p154 = por %p152, %p153
      %p155 = scmp.ne.s32.totalorder %s147, %s150
      %p156 = scmp.eq.s32.totalorder %s21, 0
      %p157 = por %p155, %p156
      %p158 = scmp.ne.s32.totalorder %s147, %s150
      %p159 = scmp.eq.s32.totalorder %s26, 1
      %p160 = por %p158, %p159
      %p161 = scmp.ne.s32.totalorder %s150, %s151
      %p162 = scmp.eq.s32.totalorder %s26, 0
      %p163 = por %p161, %p162
      %p164 = scmp.ne.s32.totalorder %s150, %s151
      %p165 = scmp.eq.s32.totalorder %s27, 1
      %p166 = por %p164, %p165
      %p168 = scmp.ne.s32.totalorder %s151, %s167
      %p169 = scmp.eq.s32.totalorder %s27, 0
      %p170 = por %p168, %p169
      %s171 = ssub.s32 %s29, %s36
      %p172 = scmp.eq.s32.totalorder %s171, 0
      %s174 = sadd.s32 %s173, 1
      %s175 = scalar_select %p172, %s173, %s174
      %p178 = pneg %p172
      %p179 = scmp.eq.s32.totalorder %s21, 1
      %p180 = por %p178, %p179
      %p181 = scmp.ne.s32.totalorder %s173, %s176
      %p182 = scmp.eq.s32.totalorder %s21, 0
      %p183 = por %p181, %p182
      %p184 = scmp.ne.s32.totalorder %s173, %s176
      %p185 = scmp.eq.s32.totalorder %s26, 1
      %p186 = por %p184, %p185
      %p187 = scmp.ne.s32.totalorder %s176, %s177
      %p188 = scmp.eq.s32.totalorder %s26, 0
      %p189 = por %p187, %p188
      %p190 = scmp.ne.s32.totalorder %s176, %s177
      %p191 = scmp.eq.s32.totalorder %s27, 1
      %p192 = por %p190, %p191
      %p194 = scmp.ne.s32.totalorder %s177, %s193
      %p195 = scmp.eq.s32.totalorder %s27, 0
      %p196 = por %p194, %p195
      %s197 = ssub.s32 %s29, %s36
      %p198 = scmp.eq.s32.totalorder %s197, 0
      %s200 = sadd.s32 %s199, 1
      %s201 = scalar_select %p198, %s199, %s200
      %p204 = pneg %p198
      %p205 = scmp.eq.s32.totalorder %s21, 1
      %p206 = por %p204, %p205
      %p207 = scmp.ne.s32.totalorder %s199, %s202
      %p208 = scmp.eq.s32.totalorder %s21, 0
      %p209 = por %p207, %p208
      %p210 = scmp.ne.s32.totalorder %s199, %s202
      %p211 = scmp.eq.s32.totalorder %s26, 1
      %p212 = por %p210, %p211
      %p213 = scmp.ne.s32.totalorder %s202, %s203
      %p214 = scmp.eq.s32.totalorder %s26, 0
      %p215 = por %p213, %p214
      %p216 = scmp.ne.s32.totalorder %s202, %s203
      %p217 = scmp.eq.s32.totalorder %s27, 1
      %p218 = por %p216, %p217
      %p220 = scmp.ne.s32.totalorder %s203, %s219
      %p221 = scmp.eq.s32.totalorder %s27, 0
      %p222 = por %p220, %p221
      %s223 = ssub.s32 %s29, %s36
      %p224 = scmp.eq.s32.totalorder %s223, 0
      %s226 = sadd.s32 %s225, 1
      %s227 = scalar_select %p224, %s225, %s226
      %p230 = pneg %p224
      %p231 = scmp.eq.s32.totalorder %s21, 1
      %p232 = por %p230, %p231
      %p233 = scmp.ne.s32.totalorder %s225, %s228
      %p234 = scmp.eq.s32.totalorder %s21, 0
      %p235 = por %p233, %p234
      %p236 = scmp.ne.s32.totalorder %s225, %s228
      %p237 = scmp.eq.s32.totalorder %s26, 1
      %p238 = por %p236, %p237
      %p239 = scmp.ne.s32.totalorder %s228, %s229
      %p240 = scmp.eq.s32.totalorder %s26, 0
      %p241 = por %p239, %p240
      %p242 = scmp.ne.s32.totalorder %s228, %s229
      %p243 = scmp.eq.s32.totalorder %s27, 1
      %p244 = por %p242, %p243
      %p246 = scmp.ne.s32.totalorder %s229, %s245
      %p247 = scmp.eq.s32.totalorder %s27, 0
      %p248 = por %p246, %p247
      %s249 = ssub.s32 %s29, %s36
      %p250 = scmp.eq.s32.totalorder %s249, 0
      %s252 = sadd.s32 %s251, 1
      %s253 = scalar_select %p250, %s251, %s252
      %p256 = pneg %p250
      %p257 = scmp.eq.s32.totalorder %s21, 1
      %p258 = por %p256, %p257
      %p259 = scmp.ne.s32.totalorder %s251, %s254
      %p260 = scmp.eq.s32.totalorder %s21, 0
      %p261 = por %p259, %p260
      %p262 = scmp.ne.s32.totalorder %s251, %s254
      %p263 = scmp.eq.s32.totalorder %s26, 1
      %p264 = por %p262, %p263
      %p265 = scmp.ne.s32.totalorder %s254, %s255
      %p266 = scmp.eq.s32.totalorder %s26, 0
      %p267 = por %p265, %p266
      %p268 = scmp.ne.s32.totalorder %s254, %s255
      %p269 = scmp.eq.s32.totalorder %s27, 1
      %p270 = por %p268, %p269
      %p272 = scmp.ne.s32.totalorder %s255, %s271
      %p273 = scmp.eq.s32.totalorder %s27, 0
      %p274 = por %p272, %p273
      %s275 = ssub.s32 %s29, %s36
      %p276 = scmp.eq.s32.totalorder %s275, 0
      %s278 = sadd.s32 %s277, 1
      %s279 = scalar_select %p276, %s277, %s278
      %p282 = pneg %p276
      %p283 = scmp.eq.s32.totalorder %s21, 1
      %p284 = por %p282, %p283
      %p285 = scmp.ne.s32.totalorder %s277, %s280
      %p286 = scmp.eq.s32.totalorder %s21, 0
      %p287 = por %p285, %p286
      %p288 = scmp.ne.s32.totalorder %s277, %s280
      %p289 = scmp.eq.s32.totalorder %s26, 1
      %p290 = por %p288, %p289
      %p291 = scmp.ne.s32.totalorder %s280, %s281
      %p292 = scmp.eq.s32.totalorder %s26, 0
      %p293 = por %p291, %p292
      %p294 = scmp.ne.s32.totalorder %s280, %s281
      %p295 = scmp.eq.s32.totalorder %s27, 1
      %p296 = por %p294, %p295
      %p298 = scmp.ne.s32.totalorder %s281, %s297
      %p299 = scmp.eq.s32.totalorder %s27, 0
      %p300 = por %p298, %p299
      %s301 = ssub.s32 %s29, %s36
      %p302 = scmp.eq.s32.totalorder %s301, 0
      %s304 = sadd.s32 %s303, 1
      %s305 = scalar_select %p302, %s303, %s304
      %p308 = pneg %p302
      %p309 = scmp.eq.s32.totalorder %s21, 1
      %p310 = por %p308, %p309
      %p311 = scmp.ne.s32.totalorder %s303, %s306
      %p312 = scmp.eq.s32.totalorder %s21, 0
      %p313 = por %p311, %p312
      %p314 = scmp.ne.s32.totalorder %s303, %s306
      %p315 = scmp.eq.s32.totalorder %s26, 1
      %p316 = por %p314, %p315
      %p317 = scmp.ne.s32.totalorder %s306, %s307
      %p318 = scmp.eq.s32.totalorder %s26, 0
      %p319 = por %p317, %p318
      %p320 = scmp.ne.s32.totalorder %s306, %s307
      %p321 = scmp.eq.s32.totalorder %s27, 1
      %p322 = por %p320, %p321
      %p324 = scmp.ne.s32.totalorder %s307, %s323
      %p325 = scmp.eq.s32.totalorder %s27, 0
      %p326 = por %p324, %p325
      %s327 = ssub.s32 %s29, %s36
      %p328 = scmp.eq.s32.totalorder %s327, 0
      %s330 = sadd.s32 %s329, 1
      %s331 = scalar_select %p328, %s329, %s330
      %p334 = pneg %p328
      %p335 = scmp.eq.s32.totalorder %s21, 1
      %p336 = por %p334, %p335
      %p337 = scmp.ne.s32.totalorder %s329, %s332
      %p338 = scmp.eq.s32.totalorder %s21, 0
      %p339 = por %p337, %p338
      %p340 = scmp.ne.s32.totalorder %s329, %s332
      %p341 = scmp.eq.s32.totalorder %s26, 1
      %p342 = por %p340, %p341
      %p343 = scmp.ne.s32.totalorder %s332, %s333
      %p344 = scmp.eq.s32.totalorder %s26, 0
      %p345 = por %p343, %p344
      %p346 = scmp.ne.s32.totalorder %s332, %s333
      %p347 = scmp.eq.s32.totalorder %s27, 1
      %p348 = por %p346, %p347
      %p350 = scmp.ne.s32.totalorder %s333, %s349
      %p351 = scmp.eq.s32.totalorder %s27, 0
      %p352 = por %p350, %p351
      %s354 = sadd.s32 %s353, 1
      %p357 = scmp.eq.s32.totalorder %s21, 1
      %p358 = scmp.ne.s32.totalorder %s353, %s355
      %p359 = scmp.eq.s32.totalorder %s21, 0
      %p360 = por %p358, %p359
      %p361 = scmp.ne.s32.totalorder %s353, %s355
      %p362 = scmp.eq.s32.totalorder %s26, 1
      %p363 = por %p361, %p362
      %p364 = scmp.ne.s32.totalorder %s355, %s356
      %p365 = scmp.eq.s32.totalorder %s26, 0
      %p366 = por %p364, %p365
      %p367 = scmp.ne.s32.totalorder %s355, %s356
      %p368 = scmp.eq.s32.totalorder %s27, 1
      %p369 = por %p367, %p368
      %p371 = scmp.ne.s32.totalorder %s356, %s370
      %p372 = scmp.eq.s32.totalorder %s27, 0
      %p373 = por %p371, %p372
      %s375 = sadd.s32 %s374, 1
      %p378 = scmp.eq.s32.totalorder %s21, 1
      %p379 = scmp.ne.s32.totalorder %s374, %s376
      %p380 = scmp.eq.s32.totalorder %s21, 0
      %p381 = por %p379, %p380
      %p382 = scmp.ne.s32.totalorder %s374, %s376
      %p383 = scmp.eq.s32.totalorder %s26, 1
      %p384 = por %p382, %p383
      %p385 = scmp.ne.s32.totalorder %s376, %s377
      %p386 = scmp.eq.s32.totalorder %s26, 0
      %p387 = por %p385, %p386
      %p388 = scmp.ne.s32.totalorder %s376, %s377
      %p389 = scmp.eq.s32.totalorder %s27, 1
      %p390 = por %p388, %p389
      %p392 = scmp.ne.s32.totalorder %s377, %s391
      %p393 = scmp.eq.s32.totalorder %s27, 0
      %p394 = por %p392, %p393
      %s395 = ssub.s32 %s28, %s40
      %p396 = scmp.eq.s32.totalorder %s395, 0
      %s398 = sadd.s32 %s397, 1
      %s399 = scalar_select %p396, %s397, %s398
      %p402 = pneg %p396
      %p403 = scmp.eq.s32.totalorder %s21, 1
      %p404 = por %p402, %p403
      %p405 = scmp.ne.s32.totalorder %s397, %s400
      %p406 = scmp.eq.s32.totalorder %s21, 0
      %p407 = por %p405, %p406
      %p408 = scmp.ne.s32.totalorder %s397, %s400
      %p409 = scmp.eq.s32.totalorder %s26, 1
      %p410 = por %p408, %p409
      %p411 = scmp.ne.s32.totalorder %s400, %s401
      %p412 = scmp.eq.s32.totalorder %s26, 0
      %p413 = por %p411, %p412
      %p414 = scmp.ne.s32.totalorder %s400, %s401
      %p415 = scmp.eq.s32.totalorder %s27, 1
      %p416 = por %p414, %p415
      %p418 = scmp.ne.s32.totalorder %s401, %s417
      %p419 = scmp.eq.s32.totalorder %s27, 0
      %p420 = por %p418, %p419
      %p421 = scmp.le.s32.totalorder 1, %s21
      %p422 = scmp.lt.s32.totalorder %s21, 3
      %p423 = pnand %p421, %p422
      %p424 = pneg %p423
      // Predicated region
      $region9: #{tpu_custom_call.1} parent=5 // pred_check
        _
      $region10: #{tpu_custom_call.1} parent=5 // pred_check_branch
        %426 = sbr.rel (%p423) target = $region12
      $region11: #{tpu_custom_call.1} parent=5 // pred_region
        %s427 = ssub.s32 %s21, 1
        // Predicated region
        $region13: #{tpu_custom_call.1} parent=11 // pred_check
          %p428 = pneg %p59
        $region14: #{tpu_custom_call.1} parent=11 // pred_check_branch
          %430 = sbr.rel (%p428) target = $region16
        $region15: #{tpu_custom_call.1} parent=11 // pred_region
          %s431 = smul.u32 2, %s30
          %p432 = scmp.lt.s32.totalorder %s431, 1
          %s433 = scalar_select %p432, %s431, 1
          %s434 = smul.addr %s433, 8
          %s435 = scalar_lea.vmem %s0, %s434
          %s436 = smul.u32 2, %s30
        $region16: #{tpu_custom_call.1} parent=11 // pred_fallthru
          _
        // Predicated region
        $region17: #{tpu_custom_call.1} parent=11 // pred_check
          %p437 = pneg %p366
        $region18: #{tpu_custom_call.1} parent=11 // pred_check_branch
          %439 = sbr.rel (%p437) target = $region20
        $region19: #{tpu_custom_call.1} parent=11 // pred_region
          _
        $region20: #{tpu_custom_call.1} parent=11 // pred_fallthru
          _
        // Predicated region
        $region21: #{tpu_custom_call.1} parent=11 // pred_check
          %p440 = pneg %p387
        $region22: #{tpu_custom_call.1} parent=11 // pred_check_branch
          %442 = sbr.rel (%p440) target = $region24
        $region23: #{tpu_custom_call.1} parent=11 // pred_region
          _
        $region24: #{tpu_custom_call.1} parent=11 // pred_fallthru
          _
      $region12: #{tpu_custom_call.1} parent=5 // pred_fallthru
        _
      %p443 = scmp.lt.s32.totalorder %s21, 2
      // Predicated region
      $region25: #{tpu_custom_call.1} parent=5 // pred_check
        %p444 = pneg %p443
      $region26: #{tpu_custom_call.1} parent=5 // pred_check_branch
        %446 = sbr.rel (%p444) target = $region28
      $region27: #{tpu_custom_call.1} parent=5 // pred_region
        // Predicated region
        $region29: #{tpu_custom_call.1} parent=27 // pred_check
          %p447 = pneg %p79
        $region30: #{tpu_custom_call.1} parent=27 // pred_check_branch
          %449 = sbr.rel (%p447) target = $region32
        $region31: #{tpu_custom_call.1} parent=27 // pred_region
          %p450 = scmp.lt.s32.totalorder %s29, 1
          %s451 = scalar_select %p450, %s29, 1
          %s452 = smul.addr %s451, 4
          %s453 = smul.addr %s452, 4
          %s454 = scalar_lea.vmem %s1, %s453
        $region32: #{tpu_custom_call.1} parent=27 // pred_fallthru
          _
        // Predicated region
        $region33: #{tpu_custom_call.1} parent=27 // pred_check
          %p455 = pneg %p105
        $region34: #{tpu_custom_call.1} parent=27 // pred_check_branch
          %457 = sbr.rel (%p455) target = $region36
        $region35: #{tpu_custom_call.1} parent=27 // pred_region
          %p458 = scmp.lt.s32.totalorder %s29, 1
          %s459 = scalar_select %p458, %s29, 1
          %s460 = smul.addr %s459, 4
          %s461 = smul.addr %s460, 4
          %s462 = scalar_lea.vmem %s2, %s461
        $region36: #{tpu_custom_call.1} parent=27 // pred_fallthru
          _
        // Predicated region
        $region37: #{tpu_custom_call.1} parent=27 // pred_check
          %p463 = pneg %p131
        $region38: #{tpu_custom_call.1} parent=27 // pred_check_branch
          %465 = sbr.rel (%p463) target = $region40
        $region39: #{tpu_custom_call.1} parent=27 // pred_region
          %p466 = scmp.lt.s32.totalorder %s29, 1
          %s467 = scalar_select %p466, %s29, 1
          %s468 = scalar_lea.vmem %s3, %s467
        $region40: #{tpu_custom_call.1} parent=27 // pred_fallthru
          _
        // Predicated region
        $region41: #{tpu_custom_call.1} parent=27 // pred_check
          %p469 = pneg %p157
        $region42: #{tpu_custom_call.1} parent=27 // pred_check_branch
          %471 = sbr.rel (%p469) target = $region44
        $region43: #{tpu_custom_call.1} parent=27 // pred_region
          %p472 = scmp.lt.s32.totalorder %s29, 1
          %s473 = scalar_select %p472, %s29, 1
          %s474 = scalar_lea.vmem %s4, %s473
        $region44: #{tpu_custom_call.1} parent=27 // pred_fallthru
          _
        // Predicated region
        $region45: #{tpu_custom_call.1} parent=27 // pred_check
          %p475 = pneg %p183
        $region46: #{tpu_custom_call.1} parent=27 // pred_check_branch
          %477 = sbr.rel (%p475) target = $region48
        $region47: #{tpu_custom_call.1} parent=27 // pred_region
          %p478 = scmp.lt.s32.totalorder %s29, 1
          %s479 = scalar_select %p478, %s29, 1
          %s480 = scalar_lea.vmem %s5, %s479
        $region48: #{tpu_custom_call.1} parent=27 // pred_fallthru
          _
        // Predicated region
        $region49: #{tpu_custom_call.1} parent=27 // pred_check
          %p481 = pneg %p209
        $region50: #{tpu_custom_call.1} parent=27 // pred_check_branch
          %483 = sbr.rel (%p481) target = $region52
        $region51: #{tpu_custom_call.1} parent=27 // pred_region
          %p484 = scmp.lt.s32.totalorder %s29, 1
          %s485 = scalar_select %p484, %s29, 1
          %s486 = scalar_lea.vmem %s6, %s485
        $region52: #{tpu_custom_call.1} parent=27 // pred_fallthru
          _
        // Predicated region
        $region53: #{tpu_custom_call.1} parent=27 // pred_check
          %p487 = pneg %p235
        $region54: #{tpu_custom_call.1} parent=27 // pred_check_branch
          %489 = sbr.rel (%p487) target = $region56
        $region55: #{tpu_custom_call.1} parent=27 // pred_region
          %p490 = scmp.lt.s32.totalorder %s29, 1
          %s491 = scalar_select %p490, %s29, 1
          %s492 = scalar_lea.vmem %s7, %s491
        $region56: #{tpu_custom_call.1} parent=27 // pred_fallthru
          _
        // Predicated region
        $region57: #{tpu_custom_call.1} parent=27 // pred_check
          %p493 = pneg %p261
        $region58: #{tpu_custom_call.1} parent=27 // pred_check_branch
          %495 = sbr.rel (%p493) target = $region60
        $region59: #{tpu_custom_call.1} parent=27 // pred_region
          %p496 = scmp.lt.s32.totalorder %s29, 1
          %s497 = scalar_select %p496, %s29, 1
          %s498 = smul.addr %s497, 4
          %s499 = smul.addr %s498, 4
          %s500 = scalar_lea.vmem %s8, %s499
        $region60: #{tpu_custom_call.1} parent=27 // pred_fallthru
          _
        // Predicated region
        $region61: #{tpu_custom_call.1} parent=27 // pred_check
          %p501 = pneg %p287
        $region62: #{tpu_custom_call.1} parent=27 // pred_check_branch
          %503 = sbr.rel (%p501) target = $region64
        $region63: #{tpu_custom_call.1} parent=27 // pred_region
          %p504 = scmp.lt.s32.totalorder %s29, 1
          %s505 = scalar_select %p504, %s29, 1
          %s506 = scalar_lea.vmem %s9, %s505
        $region64: #{tpu_custom_call.1} parent=27 // pred_fallthru
          _
        // Predicated region
        $region65: #{tpu_custom_call.1} parent=27 // pred_check
          %p507 = pneg %p313
        $region66: #{tpu_custom_call.1} parent=27 // pred_check_branch
          %509 = sbr.rel (%p507) target = $region68
        $region67: #{tpu_custom_call.1} parent=27 // pred_region
          %p510 = scmp.lt.s32.totalorder %s29, 1
          %s511 = scalar_select %p510, %s29, 1
          %s512 = smul.addr %s511, 16
          %s513 = smul.addr %s512, 4
          %s514 = scalar_lea.vmem %s10, %s513
        $region68: #{tpu_custom_call.1} parent=27 // pred_fallthru
          _
        // Predicated region
        $region69: #{tpu_custom_call.1} parent=27 // pred_check
          %p515 = pneg %p339
        $region70: #{tpu_custom_call.1} parent=27 // pred_check_branch
          %517 = sbr.rel (%p515) target = $region72
        $region71: #{tpu_custom_call.1} parent=27 // pred_region
          %p518 = scmp.lt.s32.totalorder %s29, 1
          %s519 = scalar_select %p518, %s29, 1
          %s520 = scalar_lea.vmem %s11, %s519
        $region72: #{tpu_custom_call.1} parent=27 // pred_fallthru
          _
      $region28: #{tpu_custom_call.1} parent=5 // pred_fallthru
        _
      %p521 = scmp.le.s32.totalorder 1, %s21
      %p522 = scmp.lt.s32.totalorder %s21, 3
      %p523 = pnand %p521, %p522
      %p524 = pneg %p523
      // Predicated region
      $region73: #{tpu_custom_call.1} parent=5 // pred_check
        _
      $region74: #{tpu_custom_call.1} parent=5 // pred_check_branch
        %526 = sbr.rel (%p523) target = $region76
      $region75: #{tpu_custom_call.1} parent=5 // pred_region
        %s527 = ssub.s32 %s21, 1
        %s528 = smul.u32 2, %s30
        %p529 = scmp.lt.s32.totalorder %s528, 1
        %s530 = scalar_select %p529, %s528, 1
        %s531 = smul.addr %s530, 8
        %s532 = scalar_lea.vmem %s0, %s531
        %p533 = pneg %p59
        %p534 = pneg %p56
        %p535 = scmp.lt.s32.totalorder %s31, 1
        %s536 = scalar_select %p535, %s31, 1
        %s537 = smul.addr %s536, 4
        %s538 = smul.addr %s537, 4
        %s539 = scalar_lea.vmem %s1, %s538
        %p540 = pneg %p85
        %p541 = pneg %p82
        %p542 = scmp.lt.s32.totalorder %s31, 1
        %s543 = scalar_select %p542, %s31, 1
        %s544 = smul.addr %s543, 4
        %s545 = smul.addr %s544, 4
        %s546 = scalar_lea.vmem %s2, %s545
        %p547 = pneg %p111
        %p548 = pneg %p108
        %p549 = scmp.lt.s32.totalorder %s31, 1
        %s550 = scalar_select %p549, %s31, 1
        %s551 = scalar_lea.vmem %s3, %s550
        %p552 = pneg %p137
        %p553 = pneg %p134
        %p554 = scmp.lt.s32.totalorder %s31, 1
        %s555 = scalar_select %p554, %s31, 1
        %s556 = scalar_lea.vmem %s4, %s555
        %p557 = pneg %p163
        %p558 = pneg %p160
        %p559 = scmp.lt.s32.totalorder %s31, 1
        %s560 = scalar_select %p559, %s31, 1
        %s561 = scalar_lea.vmem %s5, %s560
        %p562 = pneg %p189
        %p563 = pneg %p186
        %p564 = scmp.lt.s32.totalorder %s31, 1
        %s565 = scalar_select %p564, %s31, 1
        %s566 = scalar_lea.vmem %s6, %s565
        %p567 = pneg %p215
        %p568 = pneg %p212
        %p569 = scmp.lt.s32.totalorder %s31, 1
        %s570 = scalar_select %p569, %s31, 1
        %s571 = scalar_lea.vmem %s7, %s570
        %p572 = pneg %p241
        %p573 = pneg %p238
        %p574 = scmp.lt.s32.totalorder %s31, 1
        %s575 = scalar_select %p574, %s31, 1
        %s576 = smul.addr %s575, 4
        %s577 = smul.addr %s576, 4
        %s578 = scalar_lea.vmem %s8, %s577
        %p579 = pneg %p267
        %p580 = pneg %p264
        %p581 = scmp.lt.s32.totalorder %s31, 1
        %s582 = scalar_select %p581, %s31, 1
        %s583 = scalar_lea.vmem %s9, %s582
        %p584 = pneg %p293
        %p585 = pneg %p290
        %p586 = scmp.lt.s32.totalorder %s31, 1
        %s587 = scalar_select %p586, %s31, 1
        %s588 = smul.addr %s587, 16
        %s589 = smul.addr %s588, 4
        %s590 = scalar_lea.vmem %s10, %s589
        %p591 = pneg %p319
        %p592 = pneg %p316
        %p593 = scmp.lt.s32.totalorder %s31, 1
        %s594 = scalar_select %p593, %s31, 1
        %s595 = scalar_lea.vmem %s11, %s594
        %p596 = pneg %p345
        %p597 = pneg %p342
        %p598 = pneg %p366
        %p599 = pneg %p363
        %p600 = pneg %p387
        %p601 = pneg %p384
        %p602 = pneg %p413
        %p603 = pneg %p410
        %s604 = smul.u32 2, %s30
        %p605 = scmp.lt.s32.totalorder %s604, 1
        %s606 = scalar_select %p605, %s604, 1
        %s607 = smul.addr %s606, 8
        %s608 = scalar_lea.vmem %s0, %s607
        %s609 = smul.u32 2, %s30
        %p610 = scmp.lt.s32.totalorder %s31, 1
        %s611 = scalar_select %p610, %s31, 1
        %s612 = smul.addr %s611, 4
        %s613 = smul.addr %s612, 4
        %s614 = scalar_lea.vmem %s1, %s613
        %p615 = scmp.lt.s32.totalorder %s31, 1
        %s616 = scalar_select %p615, %s31, 1
        %s617 = smul.addr %s616, 4
        %s618 = smul.addr %s617, 4
        %s619 = scalar_lea.vmem %s2, %s618
        %p620 = scmp.lt.s32.totalorder %s31, 1
        %s621 = scalar_select %p620, %s31, 1
        %s622 = scalar_lea.vmem %s3, %s621
        %p623 = scmp.lt.s32.totalorder %s31, 1
        %s624 = scalar_select %p623, %s31, 1
        %s625 = scalar_lea.vmem %s4, %s624
        %p626 = scmp.lt.s32.totalorder %s31, 1
        %s627 = scalar_select %p626, %s31, 1
        %s628 = scalar_lea.vmem %s5, %s627
        %p629 = scmp.lt.s32.totalorder %s31, 1
        %s630 = scalar_select %p629, %s31, 1
        %s631 = scalar_lea.vmem %s6, %s630
        %p632 = scmp.lt.s32.totalorder %s31, 1
        %s633 = scalar_select %p632, %s31, 1
        %s634 = scalar_lea.vmem %s7, %s633
        %p635 = scmp.lt.s32.totalorder %s31, 1
        %s636 = scalar_select %p635, %s31, 1
        %s637 = smul.addr %s636, 4
        %s638 = smul.addr %s637, 4
        %s639 = scalar_lea.vmem %s8, %s638
        %p640 = scmp.lt.s32.totalorder %s31, 1
        %s641 = scalar_select %p640, %s31, 1
        %s642 = scalar_lea.vmem %s9, %s641
        %p643 = scmp.lt.s32.totalorder %s31, 1
        %s644 = scalar_select %p643, %s31, 1
        %s645 = smul.addr %s644, 16
        %s646 = smul.addr %s645, 4
        %s647 = scalar_lea.vmem %s10, %s646
        %p648 = scmp.lt.s32.totalorder %s31, 1
        %s649 = scalar_select %p648, %s31, 1
        %s650 = scalar_lea.vmem %s11, %s649
        %s651 = smul.u32 2, %s30
        %p653 = scmp.eq.s32.totalorder %s31, 0
        // Predicated region
        $region77: #{tpu_custom_call.1} parent=75 // pred_check
          %p654 = pneg %p653
        $region78: #{tpu_custom_call.1} parent=75 // pred_check_branch
          %656 = sbr.rel (%p654) target = $region80
        $region79: #{tpu_custom_call.1} parent=75 // pred_region
          %v657 = vld [vmem:[%s608] sm:$0xff]
          %v658 = vld [vmem:[%s608 + $0x8] sm:$0xff]
          %vm659 = vcmask 261120
          %660 = vst.msk [vmem:[#allocation3] sm:$0xff] %vm659, %v657
          %661 = vst.msk [vmem:[#allocation3 + $0x8] sm:$0xff] %vm659, %v658
        $region80: #{tpu_custom_call.1} parent=75 // pred_fallthru
          _
        %v662 = vld [vmem:[#allocation3] sm:$0xff]
        %v663 = vld [vmem:[#allocation3 + $0x8] sm:$0xff]
        %v664 = vld [vmem:[%s625] sm:$0x1]
        %v665 = vld [vmem:[%s628] sm:$0x1]
        %vm666 = vcmask 261120
        %v667 = vsel %vm666, %v662, 0.0
        %668 = vadd.xlane.f32.xlu0 %v667
        %v669 = vpop.xlane.xlu0 %668
        %v670 = vsel %vm666, %v663, 0.0
        %671 = vadd.xlane.f32.xlu0 %v670
        %v672 = vpop.xlane.xlu0 %671
        %v673 = vrcp.pop 32.0
        %v674 = vmul.f32 32.0, %v673
        %v675 = vsub.f32 1.0, %v674
        %v676 = vmul.f32 %v673, %v675
        %v677 = vadd.f32 %v673, %v676
        %vm678 = vweird.f32 %v673
        %v679 = vsel %vm678, %v673, %v677
        %v680 = vmul.f32 %v669, %v679
        %v681 = vmul.f32 %v672, %v679
        %v682 = vsub.f32 %v662, %v680
        %v683 = vsub.f32 %v663, %v681
        %v684 = vmul.f32 %v682, %v682
        %v685 = vmul.f32 %v683, %v683
        %v686 = vsel %vm666, %v684, 0.0
        %687 = vadd.xlane.f32.xlu0 %v686
        %v688 = vpop.xlane.xlu0 %687
        %v689 = vsel %vm666, %v685, 0.0
        %690 = vadd.xlane.f32.xlu0 %v689
        %v691 = vpop.xlane.xlu0 %690
        %v692 = vmul.f32 %v688, %v679
        %v693 = vmul.f32 %v691, %v679
        %v694 = vadd.f32 %v692, 1e-05
        %v695 = vadd.f32 %v693, 1e-05
        %v696 = vrsqrt.pop %v694
        %v697 = vmul.f32 %v696, %v694
        %v698 = vmul.f32 %v697, %v696
        %v699 = vmul.f32 0.5, %v698
        %v700 = vsub.f32 1.5, %v699
        %v701 = vmul.f32 %v696, %v700
        %vm702 = vweird.f32 %v694
        %vm703 = vweird.f32 %v696
        %vm704 = vmor %vm702, %vm703
        %v705 = vsel %vm704, %v696, %v701
        %v706 = vrsqrt.pop %v695
        %v707 = vmul.f32 %v706, %v695
        %v708 = vmul.f32 %v707, %v706
        %v709 = vmul.f32 0.5, %v708
        %v710 = vsub.f32 1.5, %v709
        %v711 = vmul.f32 %v706, %v710
        %vm712 = vweird.f32 %v695
        %vm713 = vweird.f32 %v706
        %vm714 = vmor %vm712, %vm713
        %v715 = vsel %vm714, %v706, %v711
        %v716 = vmul.f32 %v682, %v705
        %v717 = vmul.f32 %v683, %v715
        %v719 = vperm.slane %v664, 0
        %v721 = vmul.f32 %v716, %v719
        %v722 = vmul.f32 %v717, %v719
        %v724 = vperm.slane %v665, 0
        %v726 = vadd.f32 %v721, %v724
        %v727 = vadd.f32 %v722, %v724
        %v728 = vpack.c.bf16 %v727, %v726
        %v729 = vld [vmem:[%s614] sm:$0xf]
        %v730 = vld [vmem:[%s614 + $0x4] sm:$0xf]
        %v731 = vld [vmem:[%s614 + $0x8] sm:$0xf]
        %v732 = vld [vmem:[%s614 + $0xc] sm:$0xf]
        %v737 = vunpack.c.l.b16 %v729
        %v738 = vunpack.c.l.b16 %v730
        %v739 = vunpack.c.l.b16 %v731
        %v740 = vunpack.c.l.b16 %v732
        %v741 = vpack.c.b16 %v738, %v737
        %v742 = vpack.c.b16 %v740, %v739
        %v746 = vsel %vm666, %v728, 0
        %748 = vmatpush.bf16.msra.mxu0 0
        %749 = vmatpush.bf16.msra.mxu0 0
        %750 = vmatpush.bf16.msra.mxu0 0
        %751 = vmatpush.bf16.msra.mxu0 0
        %752 = vmatpush.bf16.msra.mxu0 0
        %753 = vmatpush.bf16.msra.mxu0 0
        %754 = vmatpush.bf16.msra.mxu0 %v742
        %755 = vmatpush.bf16.msra.mxu0 %v741
        %756 = vmatmul.bf16.gmra.mxu0 %v746
        %v757 = vpop.f32.mrf.mxu0
        %v758 = vadd.f32 0.0, %v757
        %v759 = vpop.f32.mrf.mxu0
        %v760 = vadd.f32 0.0, %v759
        %761 = vdwg.mxu0
        %v762 = vlaneseq
        %v763 = vshrl.u32 %v762, 7
        %v764 = vlaneseq
        %v765 = vand.u32 %v764, 127
        %vm766 = vcmp.le.s32.totalorder %v765, %v763
        %v767 = vsel %vm766, 0.0, -1e+30
        %v768 = vpack.c.bf16 %v758, %v758
        %v769 = vpack.c.bf16 %v760, %v760
        %v771 = vunpack.c.l.b16 %v768
        %v772 = vpack.c.b16 %v771, %v771
        %773 = vrot.lane.b32.xlu0 %v772, 96
        %v774 = vpop.permute.xlu0 %773
        %vm775 = vcmask 64512
        %v777 = vsel %vm775, %v768, 0
        %v780 = vsel %vm775, %v774, 0
        %782 = vmatpush.bf16.xpose.msra.mxu0 0
        %783 = vmatpush.bf16.xpose.msra.mxu0 0
        %784 = vmatpush.bf16.xpose.msra.mxu0 0
        %785 = vmatpush.bf16.xpose.msra.mxu0 0
        %786 = vmatpush.bf16.xpose.msra.mxu0 0
        %787 = vmatpush.bf16.xpose.msra.mxu0 0
        %788 = vmatpush.bf16.xpose.msra.mxu0 0
        %789 = vmatpush.bf16.xpose.msra.mxu0 %v780
        %790 = vmatmul.bf16.gmra.mxu0 %v777
        %v791 = vpop.f32.mrf.mxu0
        %v792 = vadd.f32 0.0, %v791
        %v793 = vpop.f32.mrf.mxu0
        %794 = vdwg.mxu0
        %v796 = vunpack.c.l.b16 %v769
        %v797 = vpack.c.b16 %v796, %v796
        %798 = vrot.lane.b32.xlu0 %v797, 96
        %v799 = vpop.permute.xlu0 %798
        %v801 = vsel %vm775, %v769, 0
        %v804 = vsel %vm775, %v799, 0
        %806 = vmatpush.bf16.xpose.msra.mxu0 0
        %807 = vmatpush.bf16.xpose.msra.mxu0 0
        %808 = vmatpush.bf16.xpose.msra.mxu0 0
        %809 = vmatpush.bf16.xpose.msra.mxu0 0
        %810 = vmatpush.bf16.xpose.msra.mxu0 0
        %811 = vmatpush.bf16.xpose.msra.mxu0 0
        %812 = vmatpush.bf16.xpose.msra.mxu0 0
        %813 = vmatpush.bf16.xpose.msra.mxu0 %v804
        %814 = vmatmul.bf16.gmra.mxu0 %v801
        %v815 = vpop.f32.mrf.mxu0
        %v816 = vadd.f32 0.0, %v815
        %v817 = vpop.f32.mrf.mxu0
        %818 = vdwg.mxu0
        %v819 = vmul.f32 %v792, 0.35355338
        %v820 = vmul.f32 %v816, 0.35355338
        %v821 = vadd.f32 %v819, %v767
        %v822 = vadd.f32 %v820, %v767
        %v823 = vsel %vm775, %v821, -inf
        %824 = vmax.xlane.f32.xlu0 %v823
        %v825 = vpop.xlane.xlu0 %824
        %v826 = vsel %vm775, %v822, -inf
        %827 = vmax.xlane.f32.xlu0 %v826
        %v828 = vpop.xlane.xlu0 %827
        %v829 = vsub.f32 %v821, %v825
        %v830 = vsub.f32 %v822, %v828
        %v831 = vmul.f32 %v829, 1.442695
        %v832 = vpow.pop %v831
        %v833 = vmul.f32 %v830, 1.442695
        %v834 = vpow.pop %v833
        %v835 = vsel %vm775, %v832, 0.0
        %836 = vadd.xlane.f32.xlu0 %v835
        %v837 = vpop.xlane.xlu0 %836
        %v838 = vsel %vm775, %v834, 0.0
        %839 = vadd.xlane.f32.xlu0 %v838
        %v840 = vpop.xlane.xlu0 %839
        %v841 = vrcp.pop %v837
        %v842 = vrcp.pop %v840
        %v843 = vmul.f32 %v832, %v841
        %v844 = vmul.f32 %v834, %v842
        %v845 = vpack.c.bf16 %v843, %v843
        %v846 = vpack.c.bf16 %v844, %v844
        %847 = vrot.lane.b32.xlu0 %v772, 64
        %v848 = vpop.permute.xlu0 %847
        %v850 = vsel %vm775, %v845, 0
        %vm852 = vcmask 1043456
        %v854 = vsel %vm852, %v848, 0
        %856 = vmatpush.bf16.msra.mxu0 0
        %857 = vmatpush.bf16.msra.mxu0 0
        %858 = vmatpush.bf16.msra.mxu0 0
        %859 = vmatpush.bf16.msra.mxu0 0
        %860 = vmatpush.bf16.msra.mxu0 0
        %861 = vmatpush.bf16.msra.mxu0 0
        %862 = vmatpush.bf16.msra.mxu0 0
        %863 = vmatpush.bf16.msra.mxu0 %v854
        %864 = vmatmul.bf16.gmra.mxu0 %v850
        %v865 = vpop.f32.mrf.mxu0
        %v866 = vadd.f32 0.0, %v865
        %v867 = vpop.f32.mrf.mxu0
        %868 = vdwg.mxu0
        %869 = vrot.lane.b32.xlu0 %v797, 64
        %v870 = vpop.permute.xlu0 %869
        %v872 = vsel %vm775, %v846, 0
        %v875 = vsel %vm852, %v870, 0
        %877 = vmatpush.bf16.msra.mxu0 0
        %878 = vmatpush.bf16.msra.mxu0 0
        %879 = vmatpush.bf16.msra.mxu0 0
        %880 = vmatpush.bf16.msra.mxu0 0
        %881 = vmatpush.bf16.msra.mxu0 0
        %882 = vmatpush.bf16.msra.mxu0 0
        %883 = vmatpush.bf16.msra.mxu0 0
        %884 = vmatpush.bf16.msra.mxu0 %v875
        %885 = vmatmul.bf16.gmra.mxu0 %v872
        %v886 = vpop.f32.mrf.mxu0
        %v887 = vadd.f32 0.0, %v886
        %v888 = vpop.f32.mrf.mxu0
        %889 = vdwg.mxu0
        %890 = vst.msk [vmem:[#allocation2] sm:$0xff] %vm775, %v866
        %891 = vst.msk [vmem:[#allocation2 + $0x8] sm:$0xff] %vm775, %v887
        %892 = vrot.lane.b32.xlu0 %v772, 120
        %v893 = vpop.permute.xlu0 %892
        %894 = vrot.lane.b32.xlu0 %v772, 88
        %v895 = vpop.permute.xlu0 %894
        %v897 = vsel %vm775, %v893, 0
        %v900 = vsel %vm775, %v895, 0
        %902 = vmatpush.bf16.xpose.msra.mxu0 0
        %903 = vmatpush.bf16.xpose.msra.mxu0 0
        %904 = vmatpush.bf16.xpose.msra.mxu0 0
        %905 = vmatpush.bf16.xpose.msra.mxu0 0
        %906 = vmatpush.bf16.xpose.msra.mxu0 0
        %907 = vmatpush.bf16.xpose.msra.mxu0 0
        %908 = vmatpush.bf16.xpose.msra.mxu0 0
        %909 = vmatpush.bf16.xpose.msra.mxu0 %v900
        %910 = vmatmul.bf16.gmra.mxu0 %v897
        %v911 = vpop.f32.mrf.mxu0
        %v912 = vadd.f32 0.0, %v911
        %v913 = vpop.f32.mrf.mxu0
        %914 = vdwg.mxu0
        %915 = vrot.lane.b32.xlu0 %v797, 120
        %v916 = vpop.permute.xlu0 %915
        %917 = vrot.lane.b32.xlu0 %v797, 88
        %v918 = vpop.permute.xlu0 %917
        %v920 = vsel %vm775, %v916, 0
        %v923 = vsel %vm775, %v918, 0
        %925 = vmatpush.bf16.xpose.msra.mxu0 0
        %926 = vmatpush.bf16.xpose.msra.mxu0 0
        %927 = vmatpush.bf16.xpose.msra.mxu0 0
        %928 = vmatpush.bf16.xpose.msra.mxu0 0
        %929 = vmatpush.bf16.xpose.msra.mxu0 0
        %930 = vmatpush.bf16.xpose.msra.mxu0 0
        %931 = vmatpush.bf16.xpose.msra.mxu0 0
        %932 = vmatpush.bf16.xpose.msra.mxu0 %v923
        %933 = vmatmul.bf16.gmra.mxu0 %v920
        %v934 = vpop.f32.mrf.mxu0
        %v935 = vadd.f32 0.0, %v934
        %v936 = vpop.f32.mrf.mxu0
        %937 = vdwg.mxu0
        %v938 = vmul.f32 %v912, 0.35355338
        %v939 = vmul.f32 %v935, 0.35355338
        %v940 = vadd.f32 %v938, %v767
        %v941 = vadd.f32 %v939, %v767
        %v942 = vsel %vm775, %v940, -inf
        %943 = vmax.xlane.f32.xlu0 %v942
        %v944 = vpop.xlane.xlu0 %943
        %v945 = vsel %vm775, %v941, -inf
        %946 = vmax.xlane.f32.xlu0 %v945
        %v947 = vpop.xlane.xlu0 %946
        %v948 = vsub.f32 %v940, %v944
        %v949 = vsub.f32 %v941, %v947
        %v950 = vmul.f32 %v948, 1.442695
        %v951 = vpow.pop %v950
        %v952 = vmul.f32 %v949, 1.442695
        %v953 = vpow.pop %v952
        %v954 = vsel %vm775, %v951, 0.0
        %955 = vadd.xlane.f32.xlu0 %v954
        %v956 = vpop.xlane.xlu0 %955
        %v957 = vsel %vm775, %v953, 0.0
        %958 = vadd.xlane.f32.xlu0 %v957
        %v959 = vpop.xlane.xlu0 %958
        %v960 = vrcp.pop %v956
        %v961 = vrcp.pop %v959
        %v962 = vmul.f32 %v951, %v960
        %v963 = vmul.f32 %v953, %v961
        %v964 = vpack.c.bf16 %v962, %v962
        %v965 = vpack.c.bf16 %v963, %v963
        %966 = vrot.lane.b32.xlu0 %v772, 56
        %v967 = vpop.permute.xlu0 %966
        %v969 = vsel %vm775, %v964, 0
        %v972 = vsel %vm852, %v967, 0
        %974 = vmatpush.bf16.msra.mxu0 0
        %975 = vmatpush.bf16.msra.mxu0 0
        %976 = vmatpush.bf16.msra.mxu0 0
        %977 = vmatpush.bf16.msra.mxu0 0
        %978 = vmatpush.bf16.msra.mxu0 0
        %979 = vmatpush.bf16.msra.mxu0 0
        %980 = vmatpush.bf16.msra.mxu0 0
        %981 = vmatpush.bf16.msra.mxu0 %v972
        %982 = vmatmul.bf16.gmra.mxu0 %v969
        %v983 = vpop.f32.mrf.mxu0
        %v984 = vadd.f32 0.0, %v983
        %v985 = vpop.f32.mrf.mxu0
        %986 = vdwg.mxu0
        %987 = vrot.lane.b32.xlu0 %v797, 56
        %v988 = vpop.permute.xlu0 %987
        %v990 = vsel %vm775, %v965, 0
        %v993 = vsel %vm852, %v988, 0
        %995 = vmatpush.bf16.msra.mxu0 0
        %996 = vmatpush.bf16.msra.mxu0 0
        %997 = vmatpush.bf16.msra.mxu0 0
        %998 = vmatpush.bf16.msra.mxu0 0
        %999 = vmatpush.bf16.msra.mxu0 0
        %1000 = vmatpush.bf16.msra.mxu0 0
        %1001 = vmatpush.bf16.msra.mxu0 0
        %1002 = vmatpush.bf16.msra.mxu0 %v993
        %1003 = vmatmul.bf16.gmra.mxu0 %v990
        %v1004 = vpop.f32.mrf.mxu0
        %v1005 = vadd.f32 0.0, %v1004
        %v1006 = vpop.f32.mrf.mxu0
        %1007 = vdwg.mxu0
        %1010 = vrot.lane.b32.xlu0 %v984, 8
        %v1011 = vpop.permute.xlu0 %1010
        %1012 = vrot.lane.b32.xlu0 %v1005, 8
        %v1013 = vpop.permute.xlu0 %1012
        %vm1016 = vcmask 130112
        %1017 = vst.msk [vmem:[#allocation2] sm:$0xff] %vm1016, %v1011
        %1018 = vst.msk [vmem:[#allocation2 + $0x8] sm:$0xff] %vm1016, %v1013
        %1019 = vrot.lane.b32.xlu0 %v772, 112
        %v1020 = vpop.permute.xlu0 %1019
        %1021 = vrot.lane.b32.xlu0 %v772, 80
        %v1022 = vpop.permute.xlu0 %1021
        %v1024 = vsel %vm775, %v1020, 0
        %v1027 = vsel %vm775, %v1022, 0
        %1029 = vmatpush.bf16.xpose.msra.mxu0 0
        %1030 = vmatpush.bf16.xpose.msra.mxu0 0
        %1031 = vmatpush.bf16.xpose.msra.mxu0 0
        %1032 = vmatpush.bf16.xpose.msra.mxu0 0
        %1033 = vmatpush.bf16.xpose.msra.mxu0 0
        %1034 = vmatpush.bf16.xpose.msra.mxu0 0
        %1035 = vmatpush.bf16.xpose.msra.mxu0 0
        %1036 = vmatpush.bf16.xpose.msra.mxu0 %v1027
        %1037 = vmatmul.bf16.gmra.mxu0 %v1024
        %v1038 = vpop.f32.mrf.mxu0
        %v1039 = vadd.f32 0.0, %v1038
        %v1040 = vpop.f32.mrf.mxu0
        %1041 = vdwg.mxu0
        %1042 = vrot.lane.b32.xlu0 %v797, 112
        %v1043 = vpop.permute.xlu0 %1042
        %1044 = vrot.lane.b32.xlu0 %v797, 80
        %v1045 = vpop.permute.xlu0 %1044
        %v1047 = vsel %vm775, %v1043, 0
        %v1050 = vsel %vm775, %v1045, 0
        %1052 = vmatpush.bf16.xpose.msra.mxu0 0
        %1053 = vmatpush.bf16.xpose.msra.mxu0 0
        %1054 = vmatpush.bf16.xpose.msra.mxu0 0
        %1055 = vmatpush.bf16.xpose.msra.mxu0 0
        %1056 = vmatpush.bf16.xpose.msra.mxu0 0
        %1057 = vmatpush.bf16.xpose.msra.mxu0 0
        %1058 = vmatpush.bf16.xpose.msra.mxu0 0
        %1059 = vmatpush.bf16.xpose.msra.mxu0 %v1050
        %1060 = vmatmul.bf16.gmra.mxu0 %v1047
        %v1061 = vpop.f32.mrf.mxu0
        %v1062 = vadd.f32 0.0, %v1061
        %v1063 = vpop.f32.mrf.mxu0
        %1064 = vdwg.mxu0
        %v1065 = vmul.f32 %v1039, 0.35355338
        %v1066 = vmul.f32 %v1062, 0.35355338
        %v1067 = vadd.f32 %v1065, %v767
        %v1068 = vadd.f32 %v1066, %v767
        %v1069 = vsel %vm775, %v1067, -inf
        %1070 = vmax.xlane.f32.xlu0 %v1069
        %v1071 = vpop.xlane.xlu0 %1070
        %v1072 = vsel %vm775, %v1068, -inf
        %1073 = vmax.xlane.f32.xlu0 %v1072
        %v1074 = vpop.xlane.xlu0 %1073
        %v1075 = vsub.f32 %v1067, %v1071
        %v1076 = vsub.f32 %v1068, %v1074
        %v1077 = vmul.f32 %v1075, 1.442695
        %v1078 = vpow.pop %v1077
        %v1079 = vmul.f32 %v1076, 1.442695
        %v1080 = vpow.pop %v1079
        %v1081 = vsel %vm775, %v1078, 0.0
        %1082 = vadd.xlane.f32.xlu0 %v1081
        %v1083 = vpop.xlane.xlu0 %1082
        %v1084 = vsel %vm775, %v1080, 0.0
        %1085 = vadd.xlane.f32.xlu0 %v1084
        %v1086 = vpop.xlane.xlu0 %1085
        %v1087 = vrcp.pop %v1083
        %v1088 = vrcp.pop %v1086
        %v1089 = vmul.f32 %v1078, %v1087
        %v1090 = vmul.f32 %v1080, %v1088
        %v1091 = vpack.c.bf16 %v1089, %v1089
        %v1092 = vpack.c.bf16 %v1090, %v1090
        %1093 = vrot.lane.b32.xlu0 %v772, 48
        %v1094 = vpop.permute.xlu0 %1093
        %v1096 = vsel %vm775, %v1091, 0
        %v1099 = vsel %vm852, %v1094, 0
        %1101 = vmatpush.bf16.msra.mxu0 0
        %1102 = vmatpush.bf16.msra.mxu0 0
        %1103 = vmatpush.bf16.msra.mxu0 0
        %1104 = vmatpush.bf16.msra.mxu0 0
        %1105 = vmatpush.bf16.msra.mxu0 0
        %1106 = vmatpush.bf16.msra.mxu0 0
        %1107 = vmatpush.bf16.msra.mxu0 0
        %1108 = vmatpush.bf16.msra.mxu0 %v1099
        %1109 = vmatmul.bf16.gmra.mxu0 %v1096
        %v1110 = vpop.f32.mrf.mxu0
        %v1111 = vadd.f32 0.0, %v1110
        %v1112 = vpop.f32.mrf.mxu0
        %1113 = vdwg.mxu0
        %1114 = vrot.lane.b32.xlu0 %v797, 48
        %v1115 = vpop.permute.xlu0 %1114
        %v1117 = vsel %vm775, %v1092, 0
        %v1120 = vsel %vm852, %v1115, 0
        %1122 = vmatpush.bf16.msra.mxu0 0
        %1123 = vmatpush.bf16.msra.mxu0 0
        %1124 = vmatpush.bf16.msra.mxu0 0
        %1125 = vmatpush.bf16.msra.mxu0 0
        %1126 = vmatpush.bf16.msra.mxu0 0
        %1127 = vmatpush.bf16.msra.mxu0 0
        %1128 = vmatpush.bf16.msra.mxu0 0
        %1129 = vmatpush.bf16.msra.mxu0 %v1120
        %1130 = vmatmul.bf16.gmra.mxu0 %v1117
        %v1131 = vpop.f32.mrf.mxu0
        %v1132 = vadd.f32 0.0, %v1131
        %v1133 = vpop.f32.mrf.mxu0
        %1134 = vdwg.mxu0
        %1137 = vrot.lane.b32.xlu0 %v1111, 16
        %v1138 = vpop.permute.xlu0 %1137
        %1139 = vrot.lane.b32.xlu0 %v1132, 16
        %v1140 = vpop.permute.xlu0 %1139
        %vm1143 = vcmask 195712
        %1144 = vst.msk [vmem:[#allocation2] sm:$0xff] %vm1143, %v1138
        %1145 = vst.msk [vmem:[#allocation2 + $0x8] sm:$0xff] %vm1143, %v1140
        %1146 = vrot.lane.b32.xlu0 %v772, 104
        %v1147 = vpop.permute.xlu0 %1146
        %1148 = vrot.lane.b32.xlu0 %v772, 72
        %v1149 = vpop.permute.xlu0 %1148
        %v1151 = vsel %vm775, %v1147, 0
        %v1154 = vsel %vm775, %v1149, 0
        %1156 = vmatpush.bf16.xpose.msra.mxu0 0
        %1157 = vmatpush.bf16.xpose.msra.mxu0 0
        %1158 = vmatpush.bf16.xpose.msra.mxu0 0
        %1159 = vmatpush.bf16.xpose.msra.mxu0 0
        %1160 = vmatpush.bf16.xpose.msra.mxu0 0
        %1161 = vmatpush.bf16.xpose.msra.mxu0 0
        %1162 = vmatpush.bf16.xpose.msra.mxu0 0
        %1163 = vmatpush.bf16.xpose.msra.mxu0 %v1154
        %1164 = vmatmul.bf16.gmra.mxu0 %v1151
        %v1165 = vpop.f32.mrf.mxu0
        %v1166 = vadd.f32 0.0, %v1165
        %v1167 = vpop.f32.mrf.mxu0
        %1168 = vdwg.mxu0
        %1169 = vrot.lane.b32.xlu0 %v797, 104
        %v1170 = vpop.permute.xlu0 %1169
        %1171 = vrot.lane.b32.xlu0 %v797, 72
        %v1172 = vpop.permute.xlu0 %1171
        %v1174 = vsel %vm775, %v1170, 0
        %v1177 = vsel %vm775, %v1172, 0
        %1179 = vmatpush.bf16.xpose.msra.mxu0 0
        %1180 = vmatpush.bf16.xpose.msra.mxu0 0
        %1181 = vmatpush.bf16.xpose.msra.mxu0 0
        %1182 = vmatpush.bf16.xpose.msra.mxu0 0
        %1183 = vmatpush.bf16.xpose.msra.mxu0 0
        %1184 = vmatpush.bf16.xpose.msra.mxu0 0
        %1185 = vmatpush.bf16.xpose.msra.mxu0 0
        %1186 = vmatpush.bf16.xpose.msra.mxu0 %v1177
        %1187 = vmatmul.bf16.gmra.mxu0 %v1174
        %v1188 = vpop.f32.mrf.mxu0
        %v1189 = vadd.f32 0.0, %v1188
        %v1190 = vpop.f32.mrf.mxu0
        %1191 = vdwg.mxu0
        %v1192 = vmul.f32 %v1166, 0.35355338
        %v1193 = vmul.f32 %v1189, 0.35355338
        %v1194 = vadd.f32 %v1192, %v767
        %v1195 = vadd.f32 %v1193, %v767
        %v1196 = vsel %vm775, %v1194, -inf
        %1197 = vmax.xlane.f32.xlu0 %v1196
        %v1198 = vpop.xlane.xlu0 %1197
        %v1199 = vsel %vm775, %v1195, -inf
        %1200 = vmax.xlane.f32.xlu0 %v1199
        %v1201 = vpop.xlane.xlu0 %1200
        %v1202 = vsub.f32 %v1194, %v1198
        %v1203 = vsub.f32 %v1195, %v1201
        %v1204 = vmul.f32 %v1202, 1.442695
        %v1205 = vpow.pop %v1204
        %v1206 = vmul.f32 %v1203, 1.442695
        %v1207 = vpow.pop %v1206
        %v1208 = vsel %vm775, %v1205, 0.0
        %1209 = vadd.xlane.f32.xlu0 %v1208
        %v1210 = vpop.xlane.xlu0 %1209
        %v1211 = vsel %vm775, %v1207, 0.0
        %1212 = vadd.xlane.f32.xlu0 %v1211
        %v1213 = vpop.xlane.xlu0 %1212
        %v1214 = vrcp.pop %v1210
        %v1215 = vrcp.pop %v1213
        %v1216 = vmul.f32 %v1205, %v1214
        %v1217 = vmul.f32 %v1207, %v1215
        %v1218 = vpack.c.bf16 %v1216, %v1216
        %v1219 = vpack.c.bf16 %v1217, %v1217
        %1220 = vrot.lane.b32.xlu0 %v772, 40
        %v1221 = vpop.permute.xlu0 %1220
        %v1223 = vsel %vm775, %v1218, 0
        %v1226 = vsel %vm852, %v1221, 0
        %1228 = vmatpush.bf16.msra.mxu0 0
        %1229 = vmatpush.bf16.msra.mxu0 0
        %1230 = vmatpush.bf16.msra.mxu0 0
        %1231 = vmatpush.bf16.msra.mxu0 0
        %1232 = vmatpush.bf16.msra.mxu0 0
        %1233 = vmatpush.bf16.msra.mxu0 0
        %1234 = vmatpush.bf16.msra.mxu0 0
        %1235 = vmatpush.bf16.msra.mxu0 %v1226
        %1236 = vmatmul.bf16.gmra.mxu0 %v1223
        %v1237 = vpop.f32.mrf.mxu0
        %v1238 = vadd.f32 0.0, %v1237
        %v1239 = vpop.f32.mrf.mxu0
        %1240 = vdwg.mxu0
        %1241 = vrot.lane.b32.xlu0 %v797, 40
        %v1242 = vpop.permute.xlu0 %1241
        %v1244 = vsel %vm775, %v1219, 0
        %v1247 = vsel %vm852, %v1242, 0
        %1249 = vmatpush.bf16.msra.mxu0 0
        %1250 = vmatpush.bf16.msra.mxu0 0
        %1251 = vmatpush.bf16.msra.mxu0 0
        %1252 = vmatpush.bf16.msra.mxu0 0
        %1253 = vmatpush.bf16.msra.mxu0 0
        %1254 = vmatpush.bf16.msra.mxu0 0
        %1255 = vmatpush.bf16.msra.mxu0 0
        %1256 = vmatpush.bf16.msra.mxu0 %v1247
        %1257 = vmatmul.bf16.gmra.mxu0 %v1244
        %v1258 = vpop.f32.mrf.mxu0
        %v1259 = vadd.f32 0.0, %v1258
        %v1260 = vpop.f32.mrf.mxu0
        %1261 = vdwg.mxu0
        %1264 = vrot.lane.b32.xlu0 %v1238, 24
        %v1265 = vpop.permute.xlu0 %1264
        %1266 = vrot.lane.b32.xlu0 %v1259, 24
        %v1267 = vpop.permute.xlu0 %1266
        %vm1270 = vcmask 261312
        %1271 = vst.msk [vmem:[#allocation2] sm:$0xff] %vm1270, %v1265
        %1272 = vst.msk [vmem:[#allocation2 + $0x8] sm:$0xff] %vm1270, %v1267
        %v1273 = vld [vmem:[#allocation2] sm:$0xff]
        %v1274 = vld [vmem:[#allocation2 + $0x8] sm:$0xff]
        %v1275 = vpack.c.bf16 %v1274, %v1273
        %v1276 = vld [vmem:[%s619] sm:$0xf]
        %v1277 = vld [vmem:[%s619 + $0x4] sm:$0xf]
        %v1278 = vld [vmem:[%s619 + $0x8] sm:$0xf]
        %v1279 = vld [vmem:[%s619 + $0xc] sm:$0xf]
        %v1284 = vunpack.c.l.b16 %v1276
        %v1285 = vunpack.c.l.b16 %v1277
        %v1286 = vunpack.c.l.b16 %v1278
        %v1287 = vunpack.c.l.b16 %v1279
        %v1288 = vpack.c.b16 %v1285, %v1284
        %v1289 = vpack.c.b16 %v1287, %v1286
        %v1293 = vsel %vm666, %v1275, 0
        %1295 = vmatpush.bf16.msra.mxu0 0
        %1296 = vmatpush.bf16.msra.mxu0 0
        %1297 = vmatpush.bf16.msra.mxu0 0
        %1298 = vmatpush.bf16.msra.mxu0 0
        %1299 = vmatpush.bf16.msra.mxu0 0
        %1300 = vmatpush.bf16.msra.mxu0 0
        %1301 = vmatpush.bf16.msra.mxu0 %v1289
        %1302 = vmatpush.bf16.msra.mxu0 %v1288
        %1303 = vmatmul.bf16.gmra.mxu0 %v1293
        %v1304 = vpop.f32.mrf.mxu0
        %v1305 = vadd.f32 0.0, %v1304
        %v1306 = vpop.f32.mrf.mxu0
        %v1307 = vadd.f32 0.0, %v1306
        %1308 = vdwg.mxu0
        %v1309 = vadd.f32 %v662, %v1305
        %v1310 = vadd.f32 %v663, %v1307
        %v1311 = vld [vmem:[%s622] sm:$0x1]
        %v1313 = vperm.slane %v1311, 0
        %v1315 = vadd.f32 %v1309, %v1313
        %v1316 = vadd.f32 %v1310, %v1313
        %v1317 = vld [vmem:[%s631] sm:$0x1]
        %v1318 = vld [vmem:[%s634] sm:$0x1]
        %v1319 = vsel %vm666, %v1315, 0.0
        %1320 = vadd.xlane.f32.xlu0 %v1319
        %v1321 = vpop.xlane.xlu0 %1320
        %v1322 = vsel %vm666, %v1316, 0.0
        %1323 = vadd.xlane.f32.xlu0 %v1322
        %v1324 = vpop.xlane.xlu0 %1323
        %v1325 = vmul.f32 %v1321, %v679
        %v1326 = vmul.f32 %v1324, %v679
        %v1327 = vsub.f32 %v1315, %v1325
        %v1328 = vsub.f32 %v1316, %v1326
        %v1329 = vmul.f32 %v1327, %v1327
        %v1330 = vmul.f32 %v1328, %v1328
        %v1331 = vsel %vm666, %v1329, 0.0
        %1332 = vadd.xlane.f32.xlu0 %v1331
        %v1333 = vpop.xlane.xlu0 %1332
        %v1334 = vsel %vm666, %v1330, 0.0
        %1335 = vadd.xlane.f32.xlu0 %v1334
        %v1336 = vpop.xlane.xlu0 %1335
        %v1337 = vmul.f32 %v1333, %v679
        %v1338 = vmul.f32 %v1336, %v679
        %v1339 = vadd.f32 %v1337, 1e-05
        %v1340 = vadd.f32 %v1338, 1e-05
        %v1341 = vrsqrt.pop %v1339
        %v1342 = vmul.f32 %v1341, %v1339
        %v1343 = vmul.f32 %v1342, %v1341
        %v1344 = vmul.f32 0.5, %v1343
        %v1345 = vsub.f32 1.5, %v1344
        %v1346 = vmul.f32 %v1341, %v1345
        %vm1347 = vweird.f32 %v1339
        %vm1348 = vweird.f32 %v1341
        %vm1349 = vmor %vm1347, %vm1348
        %v1350 = vsel %vm1349, %v1341, %v1346
        %v1351 = vrsqrt.pop %v1340
        %v1352 = vmul.f32 %v1351, %v1340
        %v1353 = vmul.f32 %v1352, %v1351
        %v1354 = vmul.f32 0.5, %v1353
        %v1355 = vsub.f32 1.5, %v1354
        %v1356 = vmul.f32 %v1351, %v1355
        %vm1357 = vweird.f32 %v1340
        %vm1358 = vweird.f32 %v1351
        %vm1359 = vmor %vm1357, %vm1358
        %v1360 = vsel %vm1359, %v1351, %v1356
        %v1361 = vmul.f32 %v1327, %v1350
        %v1362 = vmul.f32 %v1328, %v1360
        %v1364 = vperm.slane %v1317, 0
        %v1366 = vmul.f32 %v1361, %v1364
        %v1367 = vmul.f32 %v1362, %v1364
        %v1369 = vperm.slane %v1318, 0
        %v1371 = vadd.f32 %v1366, %v1369
        %v1372 = vadd.f32 %v1367, %v1369
        %v1373 = vpack.c.bf16 %v1372, %v1371
        %v1374 = vld [vmem:[%s639] sm:$0xf]
        %v1375 = vld [vmem:[%s639 + $0x4] sm:$0xf]
        %v1376 = vld [vmem:[%s639 + $0x8] sm:$0xf]
        %v1377 = vld [vmem:[%s639 + $0xc] sm:$0xf]
        %v1378 = vld [vmem:[%s642] sm:$0x1]
        %v1380 = vperm.slane %v1378, 0
        %v1386 = vunpack.c.l.b16 %v1374
        %v1387 = vunpack.c.l.b16 %v1375
        %v1388 = vunpack.c.l.b16 %v1376
        %v1389 = vunpack.c.l.b16 %v1377
        %v1390 = vpack.c.b16 %v1387, %v1386
        %v1391 = vpack.c.b16 %v1389, %v1388
        %v1395 = vsel %vm666, %v1373, 0
        %1397 = vmatpush.bf16.msra.mxu0 0
        %1398 = vmatpush.bf16.msra.mxu0 0
        %1399 = vmatpush.bf16.msra.mxu0 0
        %1400 = vmatpush.bf16.msra.mxu0 0
        %1401 = vmatpush.bf16.msra.mxu0 0
        %1402 = vmatpush.bf16.msra.mxu0 0
        %1403 = vmatpush.bf16.msra.mxu0 %v1391
        %1404 = vmatpush.bf16.msra.mxu0 %v1390
        %1405 = vmatmul.bf16.gmra.mxu0 %v1395
        %v1406 = vpop.f32.mrf.mxu0
        %v1407 = vadd.f32 %v1380, %v1406
        %v1408 = vpop.f32.mrf.mxu0
        %v1409 = vadd.f32 %v1380, %v1408
        %1410 = vdwg.mxu0
        %v1411 = vmax.f32 %v1407, 0.0
        %v1412 = vmax.f32 %v1409, 0.0
        %v1413 = vpack.c.bf16 %v1412, %v1411
        %v1414 = vld [vmem:[%s647] sm:$0xf]
        %v1415 = vld [vmem:[%s647 + $0x4] sm:$0xf]
        %v1416 = vld [vmem:[%s647 + $0x8] sm:$0xf]
        %v1417 = vld [vmem:[%s647 + $0xc] sm:$0xf]
        %v1418 = vld [vmem:[%s647 + $0x10] sm:$0xf]
        %v1419 = vld [vmem:[%s647 + $0x14] sm:$0xf]
        %v1420 = vld [vmem:[%s647 + $0x18] sm:$0xf]
        %v1421 = vld [vmem:[%s647 + $0x1c] sm:$0xf]
        %v1422 = vld [vmem:[%s647 + $0x20] sm:$0xf]
        %v1423 = vld [vmem:[%s647 + $0x24] sm:$0xf]
        %v1424 = vld [vmem:[%s647 + $0x28] sm:$0xf]
        %v1425 = vld [vmem:[%s647 + $0x2c] sm:$0xf]
        %v1426 = vld [vmem:[%s647 + $0x30] sm:$0xf]
        %v1427 = vld [vmem:[%s647 + $0x34] sm:$0xf]
        %v1428 = vld [vmem:[%s647 + $0x38] sm:$0xf]
        %v1429 = vld [vmem:[%s647 + $0x3c] sm:$0xf]
        %v1446 = vunpack.c.l.b16 %v1414
        %v1447 = vunpack.c.l.b16 %v1415
        %v1448 = vunpack.c.l.b16 %v1416
        %v1449 = vunpack.c.l.b16 %v1417
        %v1450 = vunpack.c.l.b16 %v1418
        %v1451 = vunpack.c.l.b16 %v1419
        %v1452 = vunpack.c.l.b16 %v1420
        %v1453 = vunpack.c.l.b16 %v1421
        %v1454 = vunpack.c.l.b16 %v1422
        %v1455 = vunpack.c.l.b16 %v1423
        %v1456 = vunpack.c.l.b16 %v1424
        %v1457 = vunpack.c.l.b16 %v1425
        %v1458 = vunpack.c.l.b16 %v1426
        %v1459 = vunpack.c.l.b16 %v1427
        %v1460 = vunpack.c.l.b16 %v1428
        %v1461 = vunpack.c.l.b16 %v1429
        %v1462 = vpack.c.b16 %v1447, %v1446
        %v1463 = vpack.c.b16 %v1449, %v1448
        %v1464 = vpack.c.b16 %v1451, %v1450
        %v1465 = vpack.c.b16 %v1453, %v1452
        %v1466 = vpack.c.b16 %v1455, %v1454
        %v1467 = vpack.c.b16 %v1457, %v1456
        %v1468 = vpack.c.b16 %v1459, %v1458
        %v1469 = vpack.c.b16 %v1461, %v1460
        %1478 = vmatpush.bf16.msra.mxu0 %v1469
        %1479 = vmatpush.bf16.msra.mxu0 %v1468
        %1480 = vmatpush.bf16.msra.mxu0 %v1467
        %1481 = vmatpush.bf16.msra.mxu0 %v1466
        %1482 = vmatpush.bf16.msra.mxu0 %v1465
        %1483 = vmatpush.bf16.msra.mxu0 %v1464
        %1484 = vmatpush.bf16.msra.mxu0 %v1463
        %1485 = vmatpush.bf16.msra.mxu0 %v1462
        %1486 = vmatmul.bf16.gmra.mxu0 %v1413
        %v1487 = vpop.f32.mrf.mxu0
        %v1488 = vadd.f32 0.0, %v1487
        %v1489 = vpop.f32.mrf.mxu0
        %v1490 = vadd.f32 0.0, %v1489
        %1491 = vdwg.mxu0
        %v1492 = vadd.f32 %v1315, %v1488
        %v1493 = vadd.f32 %v1316, %v1490
        %v1494 = vld [vmem:[%s650] sm:$0x1]
        %v1496 = vperm.slane %v1494, 0
        %v1498 = vadd.f32 %v1492, %v1496
        %v1499 = vadd.f32 %v1493, %v1496
        %1500 = vst.msk [vmem:[#allocation3] sm:$0xff] %vm666, %v1498
        %1501 = vst.msk [vmem:[#allocation3 + $0x8] sm:$0xff] %vm666, %v1499
        %p1502 = scmp.eq.s32.totalorder %s31, 1
        // Predicated region
        $region81: #{tpu_custom_call.1} parent=75 // pred_check
          %p1503 = pneg %p1502
        $region82: #{tpu_custom_call.1} parent=75 // pred_check_branch
          %1505 = sbr.rel (%p1503) target = $region84
        $region83: #{tpu_custom_call.1} parent=75 // pred_region
          %v1506 = vld [vmem:[%s12] sm:$0x1]
          %v1507 = vld [vmem:[%s13] sm:$0x1]
          %v1508 = vsel %vm666, %v1498, 0.0
          %1509 = vadd.xlane.f32.xlu0 %v1508
          %v1510 = vpop.xlane.xlu0 %1509
          %v1511 = vsel %vm666, %v1499, 0.0
          %1512 = vadd.xlane.f32.xlu0 %v1511
          %v1513 = vpop.xlane.xlu0 %1512
          %v1514 = vmul.f32 %v1510, %v679
          %v1515 = vmul.f32 %v1513, %v679
          %v1516 = vsub.f32 %v1498, %v1514
          %v1517 = vsub.f32 %v1499, %v1515
          %v1518 = vmul.f32 %v1516, %v1516
          %v1519 = vmul.f32 %v1517, %v1517
          %v1520 = vsel %vm666, %v1518, 0.0
          %1521 = vadd.xlane.f32.xlu0 %v1520
          %v1522 = vpop.xlane.xlu0 %1521
          %v1523 = vsel %vm666, %v1519, 0.0
          %1524 = vadd.xlane.f32.xlu0 %v1523
          %v1525 = vpop.xlane.xlu0 %1524
          %v1526 = vmul.f32 %v1522, %v679
          %v1527 = vmul.f32 %v1525, %v679
          %v1528 = vadd.f32 %v1526, 1e-05
          %v1529 = vadd.f32 %v1527, 1e-05
          %v1530 = vrsqrt.pop %v1528
          %v1531 = vmul.f32 %v1530, %v1528
          %v1532 = vmul.f32 %v1531, %v1530
          %v1533 = vmul.f32 0.5, %v1532
          %v1534 = vsub.f32 1.5, %v1533
          %v1535 = vmul.f32 %v1530, %v1534
          %vm1536 = vweird.f32 %v1528
          %vm1537 = vweird.f32 %v1530
          %vm1538 = vmor %vm1536, %vm1537
          %v1539 = vsel %vm1538, %v1530, %v1535
          %v1540 = vrsqrt.pop %v1529
          %v1541 = vmul.f32 %v1540, %v1529
          %v1542 = vmul.f32 %v1541, %v1540
          %v1543 = vmul.f32 0.5, %v1542
          %v1544 = vsub.f32 1.5, %v1543
          %v1545 = vmul.f32 %v1540, %v1544
          %vm1546 = vweird.f32 %v1529
          %vm1547 = vweird.f32 %v1540
          %vm1548 = vmor %vm1546, %vm1547
          %v1549 = vsel %vm1548, %v1540, %v1545
          %v1550 = vmul.f32 %v1516, %v1539
          %v1551 = vmul.f32 %v1517, %v1549
          %v1553 = vperm.slane %v1506, 0
          %v1555 = vmul.f32 %v1550, %v1553
          %v1556 = vmul.f32 %v1551, %v1553
          %v1558 = vperm.slane %v1507, 0
          %v1560 = vadd.f32 %v1555, %v1558
          %v1561 = vadd.f32 %v1556, %v1558
          %1562 = vst.msk [vmem:[#allocation3] sm:$0xff] %vm666, %v1560
          %1563 = vst.msk [vmem:[#allocation3 + $0x8] sm:$0xff] %vm666, %v1561
        $region84: #{tpu_custom_call.1} parent=75 // pred_fallthru
          _
        // Predicated region
        $region85: #{tpu_custom_call.1} parent=75 // pred_check
          %p1564 = pneg %p410
        $region86: #{tpu_custom_call.1} parent=75 // pred_check_branch
          %1566 = sbr.rel (%p1564) target = $region88
        $region87: #{tpu_custom_call.1} parent=75 // pred_region
          %s1567 = smul.u32 2, %s30
          %1569 = vsyncadd [#allocation4], 0
          %s1570 = smul.addr %s1567, 8
          %s1571 = scalar_lea.hbm %s14, %s1570
          %s1572 = sshll.u32 [#allocation3], 4
          %s1573 = int_to_ptr.vmem [resolvable:$true] %s1572
          %s1574 = sshll.u32 %s1571, 4
          %s1575 = int_to_ptr.hbm [resolvable:$true] %s1574
          %1580 = dma.vmem_to_hbm [thread:$0]  %s1573, 256, %s1575, [#allocation4], 128, 128, 8
        $region88: #{tpu_custom_call.1} parent=75 // pred_fallthru
          _
        // Predicated region
        $region89: #{tpu_custom_call.1} parent=75 // pred_check
          %p1581 = pneg %p410
        $region90: #{tpu_custom_call.1} parent=75 // pred_check_branch
          %1583 = sbr.rel (%p1581) target = $region92
        $region91: #{tpu_custom_call.1} parent=75 // pred_region
          %1585 = dma.done [#allocation4], 256
        $region92: #{tpu_custom_call.1} parent=75 // pred_fallthru
          _
      $region76: #{tpu_custom_call.1} parent=5 // pred_fallthru
        _
      %p1586 = scmp.le.s32.totalorder 2, %s21
      // Predicated region
      $region93: #{tpu_custom_call.1} parent=5 // pred_check
        %p1587 = pneg %p1586
      $region94: #{tpu_custom_call.1} parent=5 // pred_check_branch
        %1589 = sbr.rel (%p1587) target = $region96
      $region95: #{tpu_custom_call.1} parent=5 // pred_region
        %s1590 = ssub.s32 %s21, 2
      $region96: #{tpu_custom_call.1} parent=5 // pred_fallthru
        _
    $region6: #{tpu_custom_call.1} parent=1 // loop_footer
      %s25 = sadd.s32 1, %s21
    $region7: #{tpu_custom_call.1} parent=1 // loop_footer_branch
      %20 = sbr.rel target = $region3
    $region8: #{tpu_custom_call.1} parent=1 // loop_exit
      _
    %1591 = vsyncpa [#allocation4], 1
    %s1592 = scalar_lea.sflag [#allocation4], 1
    %1593 = vsyncpa %s1592, 1

</llo_original>
